<compile_context>
chip_gen: v7x
topology: tpu7x:2x2x1
jax: 0.10.0
libtpu: 0.0.40
codegen_flags: <defaults>
</compile_context>

<pallas_src>
import math

import jax
import jax.numpy as jnp
from jax import lax
from jax.experimental import pallas as pl
from jax.experimental.pallas import tpu as pltpu


# -------------------------- model hyper-params --------------------------
B = 2            # batch
S = 8            # seq len (MLPMixer "S")
IN_DIM = 128     # input feature dim
DIM = 128        # mixer hidden dim (small stand-in for 512)
DEPTH = 2
EF = 4           # expansion factor
N_JTS = 22
JT_DIM = 6
OUT_DIM = N_JTS * JT_DIM            # 132
OUT_PAD = 256                       # lane-dense padded output width (multiple of 128)
LN_EPS = 1e-5

# slab layout: row 0 = b_in, row 1 = lnfg, row 2 = lnfb,
# then per layer l: [ln1g, ln1b, ln2g, ln2b, bc2]  (5 rows each)
SLAB_HDR = 3
SLAB_PER_LAYER = 5


# ------------------------------ kernel math ------------------------------
def _gelu(x):
    # exact (erf-based) GELU, matching torch.nn.GELU() default
    return 0.5 * x * (1.0 + lax.erf(x * (1.0 / math.sqrt(2.0))))


def _layernorm(x, g, b):
    # single-pass LN: one sweep computes sum(x) and sum(x*x)
    inv_n = 1.0 / x.shape[-1]
    s1 = jnp.sum(x, axis=-1, keepdims=True)
    s2 = jnp.sum(x * x, axis=-1, keepdims=True)
    mu = s1 * inv_n
    var = s2 * inv_n - mu * mu
    return (x - mu) * lax.rsqrt(var + LN_EPS) * g + b


def make_mixer_kernel(batch, depth):
    tok_hi = batch * S * EF     # rows of the block-diag first token matmul
    tok_lo = batch * S          # rows of the block-diag second token matmul

    def kernel(x_ref, w_in_ref, wt1_ref, wt2_ref, btok_ref,
               wc1_ref, wc2_ref, bc1_ref, wout_ref, bout_ref, slab_ref,
               o_ref):
        f32 = jnp.float32
        bf16 = jnp.bfloat16

        x = x_ref[...]                    # [batch*S, IN_DIM] f32
        slab = slab_ref[...]              # [SLAB_HDR + 5*depth, DIM] f32
        btok = btok_ref[...]              # [depth, tok_hi + tok_lo, 1] f32

        b_in = slab[0:1, :]
        lnfg = slab[1:2, :]
        lnfb = slab[2:3, :]

        def bdot(a, w):
            # bf16 operands, f32 accumulation on the MXU
            return jnp.dot(a.astype(bf16), w, preferred_element_type=f32)

        h = bdot(x, w_in_ref[...]) + b_in                        # [batch*S, DIM]

        for l in range(depth):
            base = SLAB_HDR + SLAB_PER_LAYER * l
            ln1g = slab[base + 0:base + 1, :]
            ln1b = slab[base + 1:base + 2, :]
            ln2g = slab[base + 2:base + 3, :]
            ln2b = slab[base + 3:base + 4, :]
            bc2 = slab[base + 4:base + 5, :]
            bt1 = btok[l, 0:tok_hi, :]                           # [B*S*EF, 1]
            bt2 = btok[l, tok_hi:tok_hi + tok_lo, :]             # [B*S, 1]
            wt1 = wt1_ref[l]                                     # [B*S*EF, B*S]  bf16 block-diag
            wt2 = wt2_ref[l]                                     # [B*S, B*S*EF]  bf16 block-diag
            wc1 = wc1_ref[l]                                     # [DIM, DIM*EF] bf16
            wc2 = wc2_ref[l]                                     # [DIM*EF, DIM] bf16
            bc1 = bc1_ref[l]                                     # [1, DIM*EF] f32

            # ---- token mixing: PreNormResidual(LN -> Conv1d(S,S*EF,1) -> GELU -> Conv1d) ----
            # block-diagonal weights make this a single matmul over all batch rows
            xn = _layernorm(h, ln1g, ln1b)                       # [B*S, DIM]
            t = jnp.dot(wt1, xn.astype(bf16),
                        preferred_element_type=f32) + bt1        # [B*S*EF, DIM]
            t = _gelu(t)
            h = h + jnp.dot(wt2, t.astype(bf16),
                            preferred_element_type=f32) + bt2    # [B*S, DIM]

            # ---- channel mixing: PreNormResidual(LN -> Linear -> GELU -> Linear) ----
            xn = _layernorm(h, ln2g, ln2b)
            c = _gelu(bdot(xn, wc1) + bc1)                       # [B*S, DIM*EF]
            h = h + bdot(c, wc2) + bc2                           # [B*S, DIM]

        hf = _layernorm(h, lnfg, lnfb)
        # lane-dense padded output [batch*S, OUT_PAD]
        o_ref[...] = (bdot(hf, wout_ref[...]) + bout_ref[...]).astype(o_ref.dtype)

    return kernel


# ------------------------------ param packing ------------------------------
def _block_diag(w, reps):
    """[r, c] -> [reps*r, reps*c] block-diagonal (same block repeated)."""
    r, c = w.shape
    out = jnp.zeros((reps * r, reps * c), w.dtype)
    for i in range(reps):
        out = out.at[i * r:(i + 1) * r, i * c:(i + 1) * c].set(w)
    return out


def pack_params(p, batch):
    """Pack logical f32 params into the kernel's input layout (bf16 weights, slabs)."""
    bf = lambda a: a.astype(jnp.bfloat16)

    rows = [p["b_in"], p["lnfg"], p["lnfb"]]
    for l in range(DEPTH):
        rows += [p["ln1g"][l], p["ln1b"][l], p["ln2g"][l], p["ln2b"][l], p["bc2"][l]]
    slab = jnp.concatenate(rows, axis=0).astype(jnp.float32)     # [3 + 5*DEPTH, DIM]

    # block-diagonal token-mixing weights (shared across batch elements)
    wt1_bd = jnp.stack([_block_diag(p["wt1"][l], batch) for l in range(DEPTH)])  # [D, B*S*EF, B*S]
    wt2_bd = jnp.stack([_block_diag(p["wt2"][l], batch) for l in range(DEPTH)])  # [D, B*S, B*S*EF]
    bt1_bd = jnp.tile(p["bt1"], (1, batch, 1))                   # [DEPTH, B*S*EF, 1]
    bt2_bd = jnp.tile(p["bt2"], (1, batch, 1))                   # [DEPTH, B*S, 1]
    btok = jnp.concatenate([bt1_bd, bt2_bd], axis=1).astype(jnp.float32)  # [DEPTH, B*(S*EF+S), 1]

    wout_pad = jnp.zeros((DIM, OUT_PAD), jnp.float32).at[:, :OUT_DIM].set(p["wout"])
    bout_pad = jnp.zeros((1, OUT_PAD), jnp.float32).at[:, :OUT_DIM].set(p["bout"])

    return {
        "w_in": bf(p["w_in"]),
        "wt1": bf(wt1_bd),
        "wt2": bf(wt2_bd),
        "btok": btok,
        "wc1": bf(p["wc1"]),
        "wc2": bf(p["wc2"]),
        "bc1": p["bc1"].astype(jnp.float32),
        "wout": bf(wout_pad),
        "bout": bout_pad,
        "slab": slab,
    }


# ------------------------------ host wrapper ------------------------------
def temporal_pose_regressor(x, packed):
    """x: [B, S, IN_DIM] f32 -> y: [B, S, OUT_DIM] f32."""
    batch, seq, in_dim = x.shape
    assert seq == S and in_dim == IN_DIM
    x_flat = x.reshape(batch * seq, in_dim)

    n_inputs = 11
    vmem = pltpu.MemorySpace.VMEM
    out = pl.pallas_call(
        make_mixer_kernel(batch, DEPTH),
        out_shape=jax.ShapeDtypeStruct((batch * seq, OUT_PAD), jnp.float32),
        # no grid: single step, all operands fully resident in VMEM (single-buffered)
        in_specs=[pl.BlockSpec(memory_space=vmem)] * n_inputs,
        out_specs=pl.BlockSpec(memory_space=vmem),
    )(x_flat,
      packed["w_in"], packed["wt1"], packed["wt2"], packed["btok"],
      packed["wc1"], packed["wc2"], packed["bc1"],
      packed["wout"], packed["bout"], packed["slab"])

    return out.reshape(batch, seq, OUT_PAD)[:, :, :OUT_DIM]


# --------------------------- deterministic params ---------------------------
def init_params(key):
    ks = jax.random.split(key, 12)
    nrm = lambda k, shape, s=0.02: (s * jax.random.normal(k, shape)).astype(jnp.float32)
    return {
        # input Linear(IN_DIM, DIM), stored transposed: x @ w_in + b_in
        "w_in": nrm(ks[0], (IN_DIM, DIM)),
        "b_in": nrm(ks[1], (1, DIM)),
        # per-layer LayerNorm params (gamma=1, beta=0, torch default init)
        "ln1g": jnp.ones((DEPTH, 1, DIM), jnp.float32),
        "ln1b": jnp.zeros((DEPTH, 1, DIM), jnp.float32),
        "ln2g": jnp.ones((DEPTH, 1, DIM), jnp.float32),
        "ln2b": jnp.zeros((DEPTH, 1, DIM), jnp.float32),
        # token mixing Conv1d(S, S*EF, 1) / Conv1d(S*EF, S, 1) as matmuls over S
        "wt1": nrm(ks[2], (DEPTH, S * EF, S)),
        "bt1": nrm(ks[3], (DEPTH, S * EF, 1)),
        "wt2": nrm(ks[4], (DEPTH, S, S * EF)),
        "bt2": nrm(ks[5], (DEPTH, S, 1)),
        # channel mixing Linear(DIM, DIM*EF), Linear(DIM*EF, DIM), stored transposed
        "wc1": nrm(ks[6], (DEPTH, DIM, DIM * EF)),
        "bc1": nrm(ks[7], (DEPTH, 1, DIM * EF)),
        "wc2": nrm(ks[8], (DEPTH, DIM * EF, DIM)),
        "bc2": nrm(ks[9], (DEPTH, 1, DIM)),
        # final LayerNorm + Linear(DIM, OUT_DIM)
        "lnfg": jnp.ones((1, DIM), jnp.float32),
        "lnfb": jnp.zeros((1, DIM), jnp.float32),
        "wout": nrm(ks[10], (DIM, OUT_DIM)),
        "bout": nrm(ks[11], (1, OUT_DIM)),
    }


# ------------------------------ pure-JAX references ------------------------------
def reference_forward(x, p, mimic_bf16=True):
    """Reference MLP-Mixer forward. mimic_bf16=True mirrors the kernel's bf16 matmul
    operands (f32 accumulate); mimic_bf16=False is the full-f32 PyTorch-equivalent."""
    f32 = jnp.float32
    if mimic_bf16:
        r = lambda a: a.astype(jnp.bfloat16).astype(f32)
    else:
        r = lambda a: a.astype(f32)
    hi = jax.lax.Precision.HIGHEST

    def ln(h, g, b):
        n = h.shape[-1]
        mu = jnp.sum(h, -1, keepdims=True) / n
        var = jnp.sum(h * h, -1, keepdims=True) / n - mu * mu
        return (h - mu) * lax.rsqrt(var + LN_EPS) * g + b

    gelu = lambda v: 0.5 * v * (1.0 + lax.erf(v / jnp.sqrt(2.0)))

    h = jnp.einsum("bsi,id->bsd", r(x), r(p["w_in"]), precision=hi) + p["b_in"]
    for l in range(DEPTH):
        xn = ln(h, p["ln1g"][l], p["ln1b"][l])
        t = jnp.einsum("os,bsd->bod", r(p["wt1"][l]), r(xn), precision=hi) + p["bt1"][l]
        h = h + jnp.einsum("so,bod->bsd", r(p["wt2"][l]), r(gelu(t)), precision=hi) + p["bt2"][l]
        xn = ln(h, p["ln2g"][l], p["ln2b"][l])
        c = gelu(jnp.einsum("bsd,de->bse", r(xn), r(p["wc1"][l]), precision=hi) + p["bc1"][l])
        h = h + jnp.einsum("bse,ed->bsd", r(c), r(p["wc2"][l]), precision=hi) + p["bc2"][l]
    hf = ln(h, p["lnfg"], p["lnfb"])
    return jnp.einsum("bsd,do->bso", r(hf), r(p["wout"]), precision=hi) + p["bout"]


# ------------------------------------ main ------------------------------------
if __name__ == "__main__":
    key = jax.random.PRNGKey(0)
    kx, kp = jax.random.split(key)
    x = jax.random.normal(kx, (B, S, IN_DIM), dtype=jnp.float32)
    params = init_params(kp)
    packed = pack_params(params, B)

    y = jax.block_until_ready(temporal_pose_regressor(x, packed))
    assert y.shape == (B, S, OUT_DIM), y.shape

    # tight check against a reference that mirrors the kernel's bf16 matmul operands
    y_ref = jax.block_until_ready(reference_forward(x, params, mimic_bf16=True))
    err = float(jnp.max(jnp.abs(y - y_ref)))
    assert jnp.allclose(y, y_ref, rtol=2e-3, atol=2e-3), err

    # looser sanity check against the full-f32 (PyTorch-equivalent) reference
    y_f32 = jax.block_until_ready(reference_forward(x, params, mimic_bf16=False))
    err32 = float(jnp.max(jnp.abs(y - y_f32)))
    assert jnp.allclose(y, y_f32, rtol=2e-2, atol=2e-2), err32

    print("KERNEL_OK")
</pallas_src>

<mosaic_0001>
module attributes {stable_mosaic.version = 11 : i64} {
  func.func @kernel(%arg0: memref<16x128xf32, #tpu.memory_space<vmem>>, %arg1: memref<128x128xbf16, #tpu.memory_space<vmem>>, %arg2: memref<2x64x16xbf16, #tpu.memory_space<vmem>>, %arg3: memref<2x16x64xbf16, #tpu.memory_space<vmem>>, %arg4: memref<2x80x1xf32, #tpu.memory_space<vmem>>, %arg5: memref<2x128x512xbf16, #tpu.memory_space<vmem>>, %arg6: memref<2x512x128xbf16, #tpu.memory_space<vmem>>, %arg7: memref<2x1x512xf32, #tpu.memory_space<vmem>>, %arg8: memref<128x256xbf16, #tpu.memory_space<vmem>>, %arg9: memref<1x256xf32, #tpu.memory_space<vmem>>, %arg10: memref<13x128xf32, #tpu.memory_space<vmem>>, %arg11: memref<16x256xf32, #tpu.memory_space<vmem>>) attributes {dimension_semantics = [], scalar_prefetch = 0 : i64, scratch_operands = 0 : i64, tpu.core_type = #tpu.core_type<tc>} {
    %c0 = arith.constant 0 : index
    %c0_0 = arith.constant 0 : index
    %0 = vector.load %arg0[%c0, %c0_0] : memref<16x128xf32, #tpu.memory_space<vmem>>, vector<16x128xf32>
    %c0_1 = arith.constant 0 : index
    %c0_2 = arith.constant 0 : index
    %1 = vector.load %arg10[%c0_1, %c0_2] : memref<13x128xf32, #tpu.memory_space<vmem>>, vector<13x128xf32>
    %c0_3 = arith.constant 0 : index
    %c0_4 = arith.constant 0 : index
    %c0_5 = arith.constant 0 : index
    %2 = vector.load %arg4[%c0_3, %c0_4, %c0_5] : memref<2x80x1xf32, #tpu.memory_space<vmem>>, vector<2x80x1xf32>
    %3 = vector.extract_strided_slice %1 {offsets = [0, 0], sizes = [1, 128], strides = [1, 1]} : vector<13x128xf32> to vector<1x128xf32>
    %4 = vector.extract_strided_slice %1 {offsets = [1, 0], sizes = [1, 128], strides = [1, 1]} : vector<13x128xf32> to vector<1x128xf32>
    %5 = vector.extract_strided_slice %1 {offsets = [2, 0], sizes = [1, 128], strides = [1, 1]} : vector<13x128xf32> to vector<1x128xf32>
    %c0_6 = arith.constant 0 : index
    %c0_7 = arith.constant 0 : index
    %6 = vector.load %arg1[%c0_6, %c0_7] : memref<128x128xbf16, #tpu.memory_space<vmem>>, vector<128x128xbf16>
    %7 = arith.truncf %0 : vector<16x128xf32> to vector<16x128xbf16>
    %cst = arith.constant dense<0.000000e+00> : vector<16x128xf32>
    %8 = tpu.matmul %7, %6, %cst {dimension_numbers = #tpu.dot_dimension_numbers<[1], [0], [0], [1], [0, 0, 1, 1], [], []>} : vector<16x128xbf16>, vector<128x128xbf16>, vector<16x128xf32> -> vector<16x128xf32>
    %9 = vector.broadcast %3 : vector<1x128xf32> to vector<16x128xf32>
    %10 = arith.addf %8, %9 : vector<16x128xf32>
    %11 = vector.extract_strided_slice %1 {offsets = [3, 0], sizes = [1, 128], strides = [1, 1]} : vector<13x128xf32> to vector<1x128xf32>
    %12 = vector.extract_strided_slice %1 {offsets = [4, 0], sizes = [1, 128], strides = [1, 1]} : vector<13x128xf32> to vector<1x128xf32>
    %13 = vector.extract_strided_slice %1 {offsets = [5, 0], sizes = [1, 128], strides = [1, 1]} : vector<13x128xf32> to vector<1x128xf32>
    %14 = vector.extract_strided_slice %1 {offsets = [6, 0], sizes = [1, 128], strides = [1, 1]} : vector<13x128xf32> to vector<1x128xf32>
    %15 = vector.extract_strided_slice %1 {offsets = [7, 0], sizes = [1, 128], strides = [1, 1]} : vector<13x128xf32> to vector<1x128xf32>
    %16 = vector.extract_strided_slice %2 {offsets = [0, 0, 0], sizes = [1, 64, 1], strides = [1, 1, 1]} : vector<2x80x1xf32> to vector<1x64x1xf32>
    %17 = vector.shape_cast %16 : vector<1x64x1xf32> to vector<64x1xf32>
    %18 = vector.extract_strided_slice %2 {offsets = [0, 64, 0], sizes = [1, 16, 1], strides = [1, 1, 1]} : vector<2x80x1xf32> to vector<1x16x1xf32>
    %19 = vector.shape_cast %18 : vector<1x16x1xf32> to vector<16x1xf32>
    %c0_8 = arith.constant 0 : index
    %c0_9 = arith.constant 0 : index
    %c0_10 = arith.constant 0 : index
    %20 = vector.load %arg2[%c0_8, %c0_9, %c0_10] : memref<2x64x16xbf16, #tpu.memory_space<vmem>>, vector<1x64x16xbf16>
    %21 = vector.shape_cast %20 : vector<1x64x16xbf16> to vector<64x16xbf16>
    %c0_11 = arith.constant 0 : index
    %c0_12 = arith.constant 0 : index
    %c0_13 = arith.constant 0 : index
    %22 = vector.load %arg3[%c0_11, %c0_12, %c0_13] : memref<2x16x64xbf16, #tpu.memory_space<vmem>>, vector<1x16x64xbf16>
    %23 = vector.shape_cast %22 : vector<1x16x64xbf16> to vector<16x64xbf16>
    %c0_14 = arith.constant 0 : index
    %c0_15 = arith.constant 0 : index
    %c0_16 = arith.constant 0 : index
    %24 = vector.load %arg5[%c0_14, %c0_15, %c0_16] : memref<2x128x512xbf16, #tpu.memory_space<vmem>>, vector<1x128x512xbf16>
    %25 = vector.shape_cast %24 : vector<1x128x512xbf16> to vector<128x512xbf16>
    %c0_17 = arith.constant 0 : index
    %c0_18 = arith.constant 0 : index
    %c0_19 = arith.constant 0 : index
    %26 = vector.load %arg6[%c0_17, %c0_18, %c0_19] : memref<2x512x128xbf16, #tpu.memory_space<vmem>>, vector<1x512x128xbf16>
    %27 = vector.shape_cast %26 : vector<1x512x128xbf16> to vector<512x128xbf16>
    %c0_20 = arith.constant 0 : index
    %c0_21 = arith.constant 0 : index
    %c0_22 = arith.constant 0 : index
    %28 = vector.load %arg7[%c0_20, %c0_21, %c0_22] : memref<2x1x512xf32, #tpu.memory_space<vmem>>, vector<1x1x512xf32>
    %29 = vector.shape_cast %28 : vector<1x1x512xf32> to vector<1x512xf32>
    %cst_23 = arith.constant dense<0.000000e+00> : vector<16xf32>
    %30 = vector.multi_reduction <add>, %10, %cst_23 [1] : vector<16x128xf32> to vector<16xf32>
    %31 = vector.shape_cast %30 : vector<16xf32> to vector<16x1xf32>
    %32 = arith.mulf %10, %10 : vector<16x128xf32>
    %cst_24 = arith.constant dense<0.000000e+00> : vector<16xf32>
    %33 = vector.multi_reduction <add>, %32, %cst_24 [1] : vector<16x128xf32> to vector<16xf32>
    %34 = vector.shape_cast %33 : vector<16xf32> to vector<16x1xf32>
    %cst_25 = arith.constant 7.812500e-03 : f32
    %35 = vector.broadcast %cst_25 : f32 to vector<16x1xf32>
    %36 = arith.mulf %31, %35 : vector<16x1xf32>
    %cst_26 = arith.constant 7.812500e-03 : f32
    %37 = vector.broadcast %cst_26 : f32 to vector<16x1xf32>
    %38 = arith.mulf %34, %37 : vector<16x1xf32>
    %39 = arith.mulf %36, %36 : vector<16x1xf32>
    %40 = arith.subf %38, %39 : vector<16x1xf32>
    %41 = vector.broadcast %36 : vector<16x1xf32> to vector<16x128xf32>
    %42 = arith.subf %10, %41 : vector<16x128xf32>
    %cst_27 = arith.constant 9.99999974E-6 : f32
    %43 = vector.broadcast %cst_27 : f32 to vector<16x1xf32>
    %44 = arith.addf %40, %43 : vector<16x1xf32>
    %45 = math.rsqrt %44 : vector<16x1xf32>
    %46 = vector.broadcast %45 : vector<16x1xf32> to vector<16x128xf32>
    %47 = arith.mulf %42, %46 : vector<16x128xf32>
    %48 = vector.broadcast %11 : vector<1x128xf32> to vector<16x128xf32>
    %49 = arith.mulf %47, %48 : vector<16x128xf32>
    %50 = vector.broadcast %12 : vector<1x128xf32> to vector<16x128xf32>
    %51 = arith.addf %49, %50 : vector<16x128xf32>
    %52 = arith.truncf %51 : vector<16x128xf32> to vector<16x128xbf16>
    %cst_28 = arith.constant dense<0.000000e+00> : vector<64x128xf32>
    %53 = tpu.matmul %21, %52, %cst_28 {dimension_numbers = #tpu.dot_dimension_numbers<[1], [0], [0], [1], [0, 0, 1, 1], [], []>} : vector<64x16xbf16>, vector<16x128xbf16>, vector<64x128xf32> -> vector<64x128xf32>
    %54 = vector.broadcast %17 : vector<64x1xf32> to vector<64x128xf32>
    %55 = arith.addf %53, %54 : vector<64x128xf32>
    %cst_29 = arith.constant 5.000000e-01 : f32
    %56 = vector.broadcast %cst_29 : f32 to vector<64x128xf32>
    %57 = arith.mulf %56, %55 : vector<64x128xf32>
    %cst_30 = arith.constant 0.707106769 : f32
    %58 = vector.broadcast %cst_30 : f32 to vector<64x128xf32>
    %59 = arith.mulf %55, %58 : vector<64x128xf32>
    %60 = math.erf %59 : vector<64x128xf32>
    %cst_31 = arith.constant 1.000000e+00 : f32
    %61 = vector.broadcast %cst_31 : f32 to vector<64x128xf32>
    %62 = arith.addf %61, %60 : vector<64x128xf32>
    %63 = arith.mulf %57, %62 : vector<64x128xf32>
    %64 = arith.truncf %63 : vector<64x128xf32> to vector<64x128xbf16>
    %cst_32 = arith.constant dense<0.000000e+00> : vector<16x128xf32>
    %65 = tpu.matmul %23, %64, %cst_32 {dimension_numbers = #tpu.dot_dimension_numbers<[1], [0], [0], [1], [0, 0, 1, 1], [], []>} : vector<16x64xbf16>, vector<64x128xbf16>, vector<16x128xf32> -> vector<16x128xf32>
    %66 = arith.addf %10, %65 : vector<16x128xf32>
    %67 = vector.broadcast %19 : vector<16x1xf32> to vector<16x128xf32>
    %68 = arith.addf %66, %67 : vector<16x128xf32>
    %cst_33 = arith.constant dense<0.000000e+00> : vector<16xf32>
    %69 = vector.multi_reduction <add>, %68, %cst_33 [1] : vector<16x128xf32> to vector<16xf32>
    %70 = vector.shape_cast %69 : vector<16xf32> to vector<16x1xf32>
    %71 = arith.mulf %68, %68 : vector<16x128xf32>
    %cst_34 = arith.constant dense<0.000000e+00> : vector<16xf32>
    %72 = vector.multi_reduction <add>, %71, %cst_34 [1] : vector<16x128xf32> to vector<16xf32>
    %73 = vector.shape_cast %72 : vector<16xf32> to vector<16x1xf32>
    %cst_35 = arith.constant 7.812500e-03 : f32
    %74 = vector.broadcast %cst_35 : f32 to vector<16x1xf32>
    %75 = arith.mulf %70, %74 : vector<16x1xf32>
    %cst_36 = arith.constant 7.812500e-03 : f32
    %76 = vector.broadcast %cst_36 : f32 to vector<16x1xf32>
    %77 = arith.mulf %73, %76 : vector<16x1xf32>
    %78 = arith.mulf %75, %75 : vector<16x1xf32>
    %79 = arith.subf %77, %78 : vector<16x1xf32>
    %80 = vector.broadcast %75 : vector<16x1xf32> to vector<16x128xf32>
    %81 = arith.subf %68, %80 : vector<16x128xf32>
    %cst_37 = arith.constant 9.99999974E-6 : f32
    %82 = vector.broadcast %cst_37 : f32 to vector<16x1xf32>
    %83 = arith.addf %79, %82 : vector<16x1xf32>
    %84 = math.rsqrt %83 : vector<16x1xf32>
    %85 = vector.broadcast %84 : vector<16x1xf32> to vector<16x128xf32>
    %86 = arith.mulf %81, %85 : vector<16x128xf32>
    %87 = vector.broadcast %13 : vector<1x128xf32> to vector<16x128xf32>
    %88 = arith.mulf %86, %87 : vector<16x128xf32>
    %89 = vector.broadcast %14 : vector<1x128xf32> to vector<16x128xf32>
    %90 = arith.addf %88, %89 : vector<16x128xf32>
    %91 = arith.truncf %90 : vector<16x128xf32> to vector<16x128xbf16>
    %cst_38 = arith.constant dense<0.000000e+00> : vector<16x512xf32>
    %92 = tpu.matmul %91, %25, %cst_38 {dimension_numbers = #tpu.dot_dimension_numbers<[1], [0], [0], [1], [0, 0, 1, 1], [], []>} : vector<16x128xbf16>, vector<128x512xbf16>, vector<16x512xf32> -> vector<16x512xf32>
    %93 = vector.broadcast %29 : vector<1x512xf32> to vector<16x512xf32>
    %94 = arith.addf %92, %93 : vector<16x512xf32>
    %cst_39 = arith.constant 5.000000e-01 : f32
    %95 = vector.broadcast %cst_39 : f32 to vector<16x512xf32>
    %96 = arith.mulf %95, %94 : vector<16x512xf32>
    %cst_40 = arith.constant 0.707106769 : f32
    %97 = vector.broadcast %cst_40 : f32 to vector<16x512xf32>
    %98 = arith.mulf %94, %97 : vector<16x512xf32>
    %99 = math.erf %98 : vector<16x512xf32>
    %cst_41 = arith.constant 1.000000e+00 : f32
    %100 = vector.broadcast %cst_41 : f32 to vector<16x512xf32>
    %101 = arith.addf %100, %99 : vector<16x512xf32>
    %102 = arith.mulf %96, %101 : vector<16x512xf32>
    %103 = arith.truncf %102 : vector<16x512xf32> to vector<16x512xbf16>
    %cst_42 = arith.constant dense<0.000000e+00> : vector<16x128xf32>
    %104 = tpu.matmul %103, %27, %cst_42 {dimension_numbers = #tpu.dot_dimension_numbers<[1], [0], [0], [1], [0, 0, 1, 1], [], []>} : vector<16x512xbf16>, vector<512x128xbf16>, vector<16x128xf32> -> vector<16x128xf32>
    %105 = arith.addf %68, %104 : vector<16x128xf32>
    %106 = vector.broadcast %15 : vector<1x128xf32> to vector<16x128xf32>
    %107 = arith.addf %105, %106 : vector<16x128xf32>
    %108 = vector.extract_strided_slice %1 {offsets = [8, 0], sizes = [1, 128], strides = [1, 1]} : vector<13x128xf32> to vector<1x128xf32>
    %109 = vector.extract_strided_slice %1 {offsets = [9, 0], sizes = [1, 128], strides = [1, 1]} : vector<13x128xf32> to vector<1x128xf32>
    %110 = vector.extract_strided_slice %1 {offsets = [10, 0], sizes = [1, 128], strides = [1, 1]} : vector<13x128xf32> to vector<1x128xf32>
    %111 = vector.extract_strided_slice %1 {offsets = [11, 0], sizes = [1, 128], strides = [1, 1]} : vector<13x128xf32> to vector<1x128xf32>
    %112 = vector.extract_strided_slice %1 {offsets = [12, 0], sizes = [1, 128], strides = [1, 1]} : vector<13x128xf32> to vector<1x128xf32>
    %113 = vector.extract_strided_slice %2 {offsets = [1, 0, 0], sizes = [1, 64, 1], strides = [1, 1, 1]} : vector<2x80x1xf32> to vector<1x64x1xf32>
    %114 = vector.shape_cast %113 : vector<1x64x1xf32> to vector<64x1xf32>
    %115 = vector.extract_strided_slice %2 {offsets = [1, 64, 0], sizes = [1, 16, 1], strides = [1, 1, 1]} : vector<2x80x1xf32> to vector<1x16x1xf32>
    %116 = vector.shape_cast %115 : vector<1x16x1xf32> to vector<16x1xf32>
    %c1 = arith.constant 1 : index
    %c0_43 = arith.constant 0 : index
    %c0_44 = arith.constant 0 : index
    %117 = vector.load %arg2[%c1, %c0_43, %c0_44] : memref<2x64x16xbf16, #tpu.memory_space<vmem>>, vector<1x64x16xbf16>
    %118 = vector.shape_cast %117 : vector<1x64x16xbf16> to vector<64x16xbf16>
    %c1_45 = arith.constant 1 : index
    %c0_46 = arith.constant 0 : index
    %c0_47 = arith.constant 0 : index
    %119 = vector.load %arg3[%c1_45, %c0_46, %c0_47] : memref<2x16x64xbf16, #tpu.memory_space<vmem>>, vector<1x16x64xbf16>
    %120 = vector.shape_cast %119 : vector<1x16x64xbf16> to vector<16x64xbf16>
    %c1_48 = arith.constant 1 : index
    %c0_49 = arith.constant 0 : index
    %c0_50 = arith.constant 0 : index
    %121 = vector.load %arg5[%c1_48, %c0_49, %c0_50] : memref<2x128x512xbf16, #tpu.memory_space<vmem>>, vector<1x128x512xbf16>
    %122 = vector.shape_cast %121 : vector<1x128x512xbf16> to vector<128x512xbf16>
    %c1_51 = arith.constant 1 : index
    %c0_52 = arith.constant 0 : index
    %c0_53 = arith.constant 0 : index
    %123 = vector.load %arg6[%c1_51, %c0_52, %c0_53] : memref<2x512x128xbf16, #tpu.memory_space<vmem>>, vector<1x512x128xbf16>
    %124 = vector.shape_cast %123 : vector<1x512x128xbf16> to vector<512x128xbf16>
    %c1_54 = arith.constant 1 : index
    %c0_55 = arith.constant 0 : index
    %c0_56 = arith.constant 0 : index
    %125 = vector.load %arg7[%c1_54, %c0_55, %c0_56] : memref<2x1x512xf32, #tpu.memory_space<vmem>>, vector<1x1x512xf32>
    %126 = vector.shape_cast %125 : vector<1x1x512xf32> to vector<1x512xf32>
    %cst_57 = arith.constant dense<0.000000e+00> : vector<16xf32>
    %127 = vector.multi_reduction <add>, %107, %cst_57 [1] : vector<16x128xf32> to vector<16xf32>
    %128 = vector.shape_cast %127 : vector<16xf32> to vector<16x1xf32>
    %129 = arith.mulf %107, %107 : vector<16x128xf32>
    %cst_58 = arith.constant dense<0.000000e+00> : vector<16xf32>
    %130 = vector.multi_reduction <add>, %129, %cst_58 [1] : vector<16x128xf32> to vector<16xf32>
    %131 = vector.shape_cast %130 : vector<16xf32> to vector<16x1xf32>
    %cst_59 = arith.constant 7.812500e-03 : f32
    %132 = vector.broadcast %cst_59 : f32 to vector<16x1xf32>
    %133 = arith.mulf %128, %132 : vector<16x1xf32>
    %cst_60 = arith.constant 7.812500e-03 : f32
    %134 = vector.broadcast %cst_60 : f32 to vector<16x1xf32>
    %135 = arith.mulf %131, %134 : vector<16x1xf32>
    %136 = arith.mulf %133, %133 : vector<16x1xf32>
    %137 = arith.subf %135, %136 : vector<16x1xf32>
    %138 = vector.broadcast %133 : vector<16x1xf32> to vector<16x128xf32>
    %139 = arith.subf %107, %138 : vector<16x128xf32>
    %cst_61 = arith.constant 9.99999974E-6 : f32
    %140 = vector.broadcast %cst_61 : f32 to vector<16x1xf32>
    %141 = arith.addf %137, %140 : vector<16x1xf32>
    %142 = math.rsqrt %141 : vector<16x1xf32>
    %143 = vector.broadcast %142 : vector<16x1xf32> to vector<16x128xf32>
    %144 = arith.mulf %139, %143 : vector<16x128xf32>
    %145 = vector.broadcast %108 : vector<1x128xf32> to vector<16x128xf32>
    %146 = arith.mulf %144, %145 : vector<16x128xf32>
    %147 = vector.broadcast %109 : vector<1x128xf32> to vector<16x128xf32>
    %148 = arith.addf %146, %147 : vector<16x128xf32>
    %149 = arith.truncf %148 : vector<16x128xf32> to vector<16x128xbf16>
    %cst_62 = arith.constant dense<0.000000e+00> : vector<64x128xf32>
    %150 = tpu.matmul %118, %149, %cst_62 {dimension_numbers = #tpu.dot_dimension_numbers<[1], [0], [0], [1], [0, 0, 1, 1], [], []>} : vector<64x16xbf16>, vector<16x128xbf16>, vector<64x128xf32> -> vector<64x128xf32>
    %151 = vector.broadcast %114 : vector<64x1xf32> to vector<64x128xf32>
    %152 = arith.addf %150, %151 : vector<64x128xf32>
    %cst_63 = arith.constant 5.000000e-01 : f32
    %153 = vector.broadcast %cst_63 : f32 to vector<64x128xf32>
    %154 = arith.mulf %153, %152 : vector<64x128xf32>
    %cst_64 = arith.constant 0.707106769 : f32
    %155 = vector.broadcast %cst_64 : f32 to vector<64x128xf32>
    %156 = arith.mulf %152, %155 : vector<64x128xf32>
    %157 = math.erf %156 : vector<64x128xf32>
    %cst_65 = arith.constant 1.000000e+00 : f32
    %158 = vector.broadcast %cst_65 : f32 to vector<64x128xf32>
    %159 = arith.addf %158, %157 : vector<64x128xf32>
    %160 = arith.mulf %154, %159 : vector<64x128xf32>
    %161 = arith.truncf %160 : vector<64x128xf32> to vector<64x128xbf16>
    %cst_66 = arith.constant dense<0.000000e+00> : vector<16x128xf32>
    %162 = tpu.matmul %120, %161, %cst_66 {dimension_numbers = #tpu.dot_dimension_numbers<[1], [0], [0], [1], [0, 0, 1, 1], [], []>} : vector<16x64xbf16>, vector<64x128xbf16>, vector<16x128xf32> -> vector<16x128xf32>
    %163 = arith.addf %107, %162 : vector<16x128xf32>
    %164 = vector.broadcast %116 : vector<16x1xf32> to vector<16x128xf32>
    %165 = arith.addf %163, %164 : vector<16x128xf32>
    %cst_67 = arith.constant dense<0.000000e+00> : vector<16xf32>
    %166 = vector.multi_reduction <add>, %165, %cst_67 [1] : vector<16x128xf32> to vector<16xf32>
    %167 = vector.shape_cast %166 : vector<16xf32> to vector<16x1xf32>
    %168 = arith.mulf %165, %165 : vector<16x128xf32>
    %cst_68 = arith.constant dense<0.000000e+00> : vector<16xf32>
    %169 = vector.multi_reduction <add>, %168, %cst_68 [1] : vector<16x128xf32> to vector<16xf32>
    %170 = vector.shape_cast %169 : vector<16xf32> to vector<16x1xf32>
    %cst_69 = arith.constant 7.812500e-03 : f32
    %171 = vector.broadcast %cst_69 : f32 to vector<16x1xf32>
    %172 = arith.mulf %167, %171 : vector<16x1xf32>
    %cst_70 = arith.constant 7.812500e-03 : f32
    %173 = vector.broadcast %cst_70 : f32 to vector<16x1xf32>
    %174 = arith.mulf %170, %173 : vector<16x1xf32>
    %175 = arith.mulf %172, %172 : vector<16x1xf32>
    %176 = arith.subf %174, %175 : vector<16x1xf32>
    %177 = vector.broadcast %172 : vector<16x1xf32> to vector<16x128xf32>
    %178 = arith.subf %165, %177 : vector<16x128xf32>
    %cst_71 = arith.constant 9.99999974E-6 : f32
    %179 = vector.broadcast %cst_71 : f32 to vector<16x1xf32>
    %180 = arith.addf %176, %179 : vector<16x1xf32>
    %181 = math.rsqrt %180 : vector<16x1xf32>
    %182 = vector.broadcast %181 : vector<16x1xf32> to vector<16x128xf32>
    %183 = arith.mulf %178, %182 : vector<16x128xf32>
    %184 = vector.broadcast %110 : vector<1x128xf32> to vector<16x128xf32>
    %185 = arith.mulf %183, %184 : vector<16x128xf32>
    %186 = vector.broadcast %111 : vector<1x128xf32> to vector<16x128xf32>
    %187 = arith.addf %185, %186 : vector<16x128xf32>
    %188 = arith.truncf %187 : vector<16x128xf32> to vector<16x128xbf16>
    %cst_72 = arith.constant dense<0.000000e+00> : vector<16x512xf32>
    %189 = tpu.matmul %188, %122, %cst_72 {dimension_numbers = #tpu.dot_dimension_numbers<[1], [0], [0], [1], [0, 0, 1, 1], [], []>} : vector<16x128xbf16>, vector<128x512xbf16>, vector<16x512xf32> -> vector<16x512xf32>
    %190 = vector.broadcast %126 : vector<1x512xf32> to vector<16x512xf32>
    %191 = arith.addf %189, %190 : vector<16x512xf32>
    %cst_73 = arith.constant 5.000000e-01 : f32
    %192 = vector.broadcast %cst_73 : f32 to vector<16x512xf32>
    %193 = arith.mulf %192, %191 : vector<16x512xf32>
    %cst_74 = arith.constant 0.707106769 : f32
    %194 = vector.broadcast %cst_74 : f32 to vector<16x512xf32>
    %195 = arith.mulf %191, %194 : vector<16x512xf32>
    %196 = math.erf %195 : vector<16x512xf32>
    %cst_75 = arith.constant 1.000000e+00 : f32
    %197 = vector.broadcast %cst_75 : f32 to vector<16x512xf32>
    %198 = arith.addf %197, %196 : vector<16x512xf32>
    %199 = arith.mulf %193, %198 : vector<16x512xf32>
    %200 = arith.truncf %199 : vector<16x512xf32> to vector<16x512xbf16>
    %cst_76 = arith.constant dense<0.000000e+00> : vector<16x128xf32>
    %201 = tpu.matmul %200, %124, %cst_76 {dimension_numbers = #tpu.dot_dimension_numbers<[1], [0], [0], [1], [0, 0, 1, 1], [], []>} : vector<16x512xbf16>, vector<512x128xbf16>, vector<16x128xf32> -> vector<16x128xf32>
    %202 = arith.addf %165, %201 : vector<16x128xf32>
    %203 = vector.broadcast %112 : vector<1x128xf32> to vector<16x128xf32>
    %204 = arith.addf %202, %203 : vector<16x128xf32>
    %cst_77 = arith.constant dense<0.000000e+00> : vector<16xf32>
    %205 = vector.multi_reduction <add>, %204, %cst_77 [1] : vector<16x128xf32> to vector<16xf32>
    %206 = vector.shape_cast %205 : vector<16xf32> to vector<16x1xf32>
    %207 = arith.mulf %204, %204 : vector<16x128xf32>
    %cst_78 = arith.constant dense<0.000000e+00> : vector<16xf32>
    %208 = vector.multi_reduction <add>, %207, %cst_78 [1] : vector<16x128xf32> to vector<16xf32>
    %209 = vector.shape_cast %208 : vector<16xf32> to vector<16x1xf32>
    %cst_79 = arith.constant 7.812500e-03 : f32
    %210 = vector.broadcast %cst_79 : f32 to vector<16x1xf32>
    %211 = arith.mulf %206, %210 : vector<16x1xf32>
    %cst_80 = arith.constant 7.812500e-03 : f32
    %212 = vector.broadcast %cst_80 : f32 to vector<16x1xf32>
    %213 = arith.mulf %209, %212 : vector<16x1xf32>
    %214 = arith.mulf %211, %211 : vector<16x1xf32>
    %215 = arith.subf %213, %214 : vector<16x1xf32>
    %216 = vector.broadcast %211 : vector<16x1xf32> to vector<16x128xf32>
    %217 = arith.subf %204, %216 : vector<16x128xf32>
    %cst_81 = arith.constant 9.99999974E-6 : f32
    %218 = vector.broadcast %cst_81 : f32 to vector<16x1xf32>
    %219 = arith.addf %215, %218 : vector<16x1xf32>
    %220 = math.rsqrt %219 : vector<16x1xf32>
    %221 = vector.broadcast %220 : vector<16x1xf32> to vector<16x128xf32>
    %222 = arith.mulf %217, %221 : vector<16x128xf32>
    %223 = vector.broadcast %4 : vector<1x128xf32> to vector<16x128xf32>
    %224 = arith.mulf %222, %223 : vector<16x128xf32>
    %225 = vector.broadcast %5 : vector<1x128xf32> to vector<16x128xf32>
    %226 = arith.addf %224, %225 : vector<16x128xf32>
    %c0_82 = arith.constant 0 : index
    %c0_83 = arith.constant 0 : index
    %227 = vector.load %arg8[%c0_82, %c0_83] : memref<128x256xbf16, #tpu.memory_space<vmem>>, vector<128x256xbf16>
    %228 = arith.truncf %226 : vector<16x128xf32> to vector<16x128xbf16>
    %cst_84 = arith.constant dense<0.000000e+00> : vector<16x256xf32>
    %229 = tpu.matmul %228, %227, %cst_84 {dimension_numbers = #tpu.dot_dimension_numbers<[1], [0], [0], [1], [0, 0, 1, 1], [], []>} : vector<16x128xbf16>, vector<128x256xbf16>, vector<16x256xf32> -> vector<16x256xf32>
    %c0_85 = arith.constant 0 : index
    %c0_86 = arith.constant 0 : index
    %230 = vector.load %arg9[%c0_85, %c0_86] : memref<1x256xf32, #tpu.memory_space<vmem>>, vector<1x256xf32>
    %231 = vector.broadcast %230 : vector<1x256xf32> to vector<16x256xf32>
    %232 = arith.addf %229, %231 : vector<16x256xf32>
    %c0_87 = arith.constant 0 : index
    %c0_88 = arith.constant 0 : index
    %233 = vector.load %arg11[%c0_87, %c0_88] : memref<16x256xf32, #tpu.memory_space<vmem>>, vector<16x256xf32>
    tpu.vector_store %arg11[%c0_87, %c0_88], %232 {strides = array<i32>} : memref<16x256xf32, #tpu.memory_space<vmem>>, vector<16x256xf32>,
    return
  }
}

</mosaic_0001>

<llo_original>
// kernel: tpu_custom_call.1
$region0: #{tpu_custom_call.1}
  #allocation0 [shape = 'u32[]', space=smem, size = 0x4, offset = 0x4, fixed_abs, tag = 'smem constant byte address 0x4 - core index']
  #allocation1 [shape = 'u32[144,128]{1,0:T(1,128)}', space=vmem, size = 0x12000, scoped, tag = 'internal scratch']
  %s0 = inlined_call_operand.vmem [shape: f32[16,128], index: 0, kind: input, shape index: {}]
  %s1 = inlined_call_operand.vmem [shape: bf16[128,128], index: 1, kind: input, shape index: {}]
  %s2 = inlined_call_operand.vmem [shape: bf16[2,64,16], index: 2, kind: input, shape index: {}]
  %s3 = inlined_call_operand.vmem [shape: bf16[2,16,64], index: 3, kind: input, shape index: {}]
  %s4 = inlined_call_operand.vmem [shape: f32[2,80,1], index: 4, kind: input, shape index: {}]
  %s5 = inlined_call_operand.hbm [shape: bf16[2,128,512], index: 5, kind: input, shape index: {}]
  %s6 = inlined_call_operand.hbm [shape: bf16[2,512,128], index: 6, kind: input, shape index: {}]
  %s7 = inlined_call_operand.vmem [shape: f32[2,1,512], index: 7, kind: input, shape index: {}]
  %s8 = inlined_call_operand.vmem [shape: bf16[128,256], index: 8, kind: input, shape index: {}]
  %s9 = inlined_call_operand.vmem [shape: f32[1,256], index: 9, kind: input, shape index: {}]
  %s10 = inlined_call_operand.vmem [shape: f32[13,128], index: 10, kind: input, shape index: {}]
  %s11 = inlined_call_operand.hbm [shape: f32[16,256], index: 11, kind: output, shape index: {}]
  %s12 = sld [smem:[#allocation0]]
  $region62: #{tpu_custom_call.1} parent=0
    _
  %s14 = ssub.s32 1, %s12
  %s15 = scalar_select 0, %s14, %s12
  $region1: #{tpu_custom_call.1} parent=0
    #allocation2 [shape = 'u8[262144]{0}', space=vmem, size = 0x40000, scoped, tag = 'input window, operand 5, single buffered']
    #allocation3 [shape = 's32[1]{0}', space=sflag, size = 0x4, scoped, tag = 'scoped memory for tpu_custom_call.1']
    #allocation4 [shape = 's32[1]{0}', space=sflag, size = 0x4, scoped, tag = 'scoped memory for tpu_custom_call.1']
    #allocation5 [shape = 'u8[262144]{0}', space=vmem, size = 0x40000, scoped, tag = 'input window, operand 6, single buffered']
    #allocation6 [shape = 's32[1]{0}', space=sflag, size = 0x4, scoped, tag = 'scoped memory for tpu_custom_call.1']
    #allocation7 [shape = 'u8[16384]{0}', space=vmem, size = 0x4000, scoped, tag = 'output window, operand 0, single buffered']
    %16 = vsyncpa [#allocation3], 0
    %17 = vsyncpa [#allocation6], 0
    %18 = vsyncpa [#allocation4], 0
    // Predicated region
    $region2: #{tpu_custom_call.1} parent=1 // pred_check
      _
    $region3: #{tpu_custom_call.1} parent=1 // pred_check_branch
      %20 = sbr.rel (0) target = $region5
    $region4: #{tpu_custom_call.1} parent=1 // pred_region
      _
    $region5: #{tpu_custom_call.1} parent=1 // pred_fallthru
      _
    // Predicated region
    $region6: #{tpu_custom_call.1} parent=1 // pred_check
      _
    $region7: #{tpu_custom_call.1} parent=1 // pred_check_branch
      %22 = sbr.rel (0) target = $region9
    $region8: #{tpu_custom_call.1} parent=1 // pred_region
      _
    $region9: #{tpu_custom_call.1} parent=1 // pred_fallthru
      _
    // Predicated region
    $region10: #{tpu_custom_call.1} parent=1 // pred_check
      _
    $region11: #{tpu_custom_call.1} parent=1 // pred_check_branch
      %24 = sbr.rel (0) target = $region13
    $region12: #{tpu_custom_call.1} parent=1 // pred_region
      _
    $region13: #{tpu_custom_call.1} parent=1 // pred_fallthru
      _
    // Predicated region
    $region14: #{tpu_custom_call.1} parent=1 // pred_check
      _
    $region15: #{tpu_custom_call.1} parent=1 // pred_check_branch
      %26 = sbr.rel (0) target = $region17
    $region16: #{tpu_custom_call.1} parent=1 // pred_region
      _
    $region17: #{tpu_custom_call.1} parent=1 // pred_fallthru
      _
    // Predicated region
    $region18: #{tpu_custom_call.1} parent=1 // pred_check
      _
    $region19: #{tpu_custom_call.1} parent=1 // pred_check_branch
      %28 = sbr.rel (0) target = $region21
    $region20: #{tpu_custom_call.1} parent=1 // pred_region
      _
    $region21: #{tpu_custom_call.1} parent=1 // pred_fallthru
      _
    // Predicated region
    $region22: #{tpu_custom_call.1} parent=1 // pred_check
      _
    $region23: #{tpu_custom_call.1} parent=1 // pred_check_branch
      %30 = sbr.rel (0) target = $region25
    $region24: #{tpu_custom_call.1} parent=1 // pred_region
      %s32 = ssub.s32 8192, 8192
      %33 = vsyncadd [#allocation3], %s32
      %s34 = sshll.u32 [#allocation2], 4
      %s35 = int_to_ptr.vmem [resolvable:$true] %s34
      %40 = dma.hbm_to_vmem [thread:$0]  %s5, 8192, %s35, [#allocation3], 256, 256, 16
    $region25: #{tpu_custom_call.1} parent=1 // pred_fallthru
      _
    // Predicated region
    $region26: #{tpu_custom_call.1} parent=1 // pred_check
      _
    $region27: #{tpu_custom_call.1} parent=1 // pred_check_branch
      %42 = sbr.rel (0) target = $region29
    $region28: #{tpu_custom_call.1} parent=1 // pred_region
      %s44 = ssub.s32 8192, 8192
      %45 = vsyncadd [#allocation6], %s44
      %s46 = sshll.u32 [#allocation5], 4
      %s47 = int_to_ptr.vmem [resolvable:$true] %s46
      %52 = dma.hbm_to_vmem [thread:$0]  %s6, 8192, %s47, [#allocation6], 64, 64, 4
    $region29: #{tpu_custom_call.1} parent=1 // pred_fallthru
      _
    // Predicated region
    $region30: #{tpu_custom_call.1} parent=1 // pred_check
      _
    $region31: #{tpu_custom_call.1} parent=1 // pred_check_branch
      %54 = sbr.rel (0) target = $region33
    $region32: #{tpu_custom_call.1} parent=1 // pred_region
      _
    $region33: #{tpu_custom_call.1} parent=1 // pred_fallthru
      _
    // Predicated region
    $region34: #{tpu_custom_call.1} parent=1 // pred_check
      _
    $region35: #{tpu_custom_call.1} parent=1 // pred_check_branch
      %56 = sbr.rel (0) target = $region37
    $region36: #{tpu_custom_call.1} parent=1 // pred_region
      _
    $region37: #{tpu_custom_call.1} parent=1 // pred_fallthru
      _
    // Predicated region
    $region38: #{tpu_custom_call.1} parent=1 // pred_check
      _
    $region39: #{tpu_custom_call.1} parent=1 // pred_check_branch
      %58 = sbr.rel (0) target = $region41
    $region40: #{tpu_custom_call.1} parent=1 // pred_region
      _
    $region41: #{tpu_custom_call.1} parent=1 // pred_fallthru
      _
    // Predicated region
    $region42: #{tpu_custom_call.1} parent=1 // pred_check
      _
    $region43: #{tpu_custom_call.1} parent=1 // pred_check_branch
      %60 = sbr.rel (0) target = $region45
    $region44: #{tpu_custom_call.1} parent=1 // pred_region
      _
    $region45: #{tpu_custom_call.1} parent=1 // pred_fallthru
      _
    // Predicated region
    $region46: #{tpu_custom_call.1} parent=1 // pred_check
      _
    $region47: #{tpu_custom_call.1} parent=1 // pred_check_branch
      %62 = sbr.rel (0) target = $region49
    $region48: #{tpu_custom_call.1} parent=1 // pred_region
      %63 = dma.done [#allocation3], 8192
    $region49: #{tpu_custom_call.1} parent=1 // pred_fallthru
      _
    // Predicated region
    $region50: #{tpu_custom_call.1} parent=1 // pred_check
      _
    $region51: #{tpu_custom_call.1} parent=1 // pred_check_branch
      %65 = sbr.rel (0) target = $region53
    $region52: #{tpu_custom_call.1} parent=1 // pred_region
      %66 = dma.done [#allocation6], 8192
    $region53: #{tpu_custom_call.1} parent=1 // pred_fallthru
      _
    %v68 = vld [vmem:[%s0] sm:$0xff]
    %v69 = vld [vmem:[%s0 + $0x8] sm:$0xff]
    %v70 = vld [vmem:[%s10] sm:$0xff]
    %v71 = vld [vmem:[%s10 + $0x8] sm:$0x1f]
    %v72 = vld [vmem:[%s4] sm:$0xff]
    %v73 = vld [vmem:[%s4 + $0x8] sm:$0xff]
    %v74 = vld [vmem:[%s4 + $0x10] sm:$0xff]
    %v75 = vld [vmem:[%s4 + $0x18] sm:$0xff]
    %v76 = vld [vmem:[%s4 + $0x20] sm:$0xff]
    %v77 = vld [vmem:[%s4 + $0x28] sm:$0xff]
    %v78 = vld [vmem:[%s4 + $0x30] sm:$0xff]
    %v79 = vld [vmem:[%s4 + $0x38] sm:$0xff]
    %v80 = vld [vmem:[%s4 + $0x40] sm:$0xff]
    %v81 = vld [vmem:[%s4 + $0x48] sm:$0xff]
    %v82 = vld [vmem:[%s4 + $0x50] sm:$0xff]
    %v83 = vld [vmem:[%s4 + $0x58] sm:$0xff]
    %v84 = vld [vmem:[%s4 + $0x60] sm:$0xff]
    %v85 = vld [vmem:[%s4 + $0x68] sm:$0xff]
    %v86 = vld [vmem:[%s4 + $0x70] sm:$0xff]
    %v87 = vld [vmem:[%s4 + $0x78] sm:$0xff]
    %v88 = vld [vmem:[%s4 + $0x80] sm:$0xff]
    %v89 = vld [vmem:[%s4 + $0x88] sm:$0xff]
    %v90 = vld [vmem:[%s4 + $0x90] sm:$0xff]
    %v91 = vld [vmem:[%s4 + $0x98] sm:$0xff]
    %v92 = vld [vmem:[%s1] sm:$0xf]
    %v93 = vld [vmem:[%s1 + $0x4] sm:$0xf]
    %v94 = vld [vmem:[%s1 + $0x8] sm:$0xf]
    %v95 = vld [vmem:[%s1 + $0xc] sm:$0xf]
    %v96 = vld [vmem:[%s1 + $0x10] sm:$0xf]
    %v97 = vld [vmem:[%s1 + $0x14] sm:$0xf]
    %v98 = vld [vmem:[%s1 + $0x18] sm:$0xf]
    %v99 = vld [vmem:[%s1 + $0x1c] sm:$0xf]
    %v100 = vld [vmem:[%s1 + $0x20] sm:$0xf]
    %v101 = vld [vmem:[%s1 + $0x24] sm:$0xf]
    %v102 = vld [vmem:[%s1 + $0x28] sm:$0xf]
    %v103 = vld [vmem:[%s1 + $0x2c] sm:$0xf]
    %v104 = vld [vmem:[%s1 + $0x30] sm:$0xf]
    %v105 = vld [vmem:[%s1 + $0x34] sm:$0xf]
    %v106 = vld [vmem:[%s1 + $0x38] sm:$0xf]
    %v107 = vld [vmem:[%s1 + $0x3c] sm:$0xf]
    %v108 = vpack.c.bf16 %v69, %v68
    %v109 = vlaneseq
    %v110 = vshrl.u32 %v109, 7
    %v111 = vsub.s32 0, %v110
    %v112 = vrot.slane %v70, %v111
    %v129 = vunpack.c.l.b16 %v92
    %v130 = vunpack.c.l.b16 %v93
    %v131 = vunpack.c.l.b16 %v94
    %v132 = vunpack.c.l.b16 %v95
    %v133 = vunpack.c.l.b16 %v96
    %v134 = vunpack.c.l.b16 %v97
    %v135 = vunpack.c.l.b16 %v98
    %v136 = vunpack.c.l.b16 %v99
    %v137 = vunpack.c.l.b16 %v100
    %v138 = vunpack.c.l.b16 %v101
    %v139 = vunpack.c.l.b16 %v102
    %v140 = vunpack.c.l.b16 %v103
    %v141 = vunpack.c.l.b16 %v104
    %v142 = vunpack.c.l.b16 %v105
    %v143 = vunpack.c.l.b16 %v106
    %v144 = vunpack.c.l.b16 %v107
    %v145 = vpack.c.b16 %v130, %v129
    %v146 = vpack.c.b16 %v132, %v131
    %v147 = vpack.c.b16 %v134, %v133
    %v148 = vpack.c.b16 %v136, %v135
    %v149 = vpack.c.b16 %v138, %v137
    %v150 = vpack.c.b16 %v140, %v139
    %v151 = vpack.c.b16 %v142, %v141
    %v152 = vpack.c.b16 %v144, %v143
    %161 = vmatprep.subr.bf16.mxu0 0
    %162 = vmatpush1.bf16.msra.mxu0 %v145
    %163 = vmatprep.subr.bf16.mxu0 0
    %164 = vmatpush1.bf16.msra.mxu0 %v146
    %165 = vmatprep.subr.bf16.mxu0 0
    %166 = vmatpush1.bf16.msra.mxu0 %v147
    %167 = vmatprep.subr.bf16.mxu0 0
    %168 = vmatpush1.bf16.msra.mxu0 %v148
    %169 = vmatprep.subr.bf16.mxu0 0
    %170 = vmatpush1.bf16.msra.mxu0 %v149
    %171 = vmatprep.subr.bf16.mxu0 0
    %172 = vmatpush1.bf16.msra.mxu0 %v150
    %173 = vmatprep.subr.bf16.mxu0 0
    %174 = vmatpush1.bf16.msra.mxu0 %v151
    %175 = vmatprep.subr.bf16.mxu0 0
    %176 = vmatpush1.bf16.msra.mxu0 %v152
    %177 = vmatprep.subr.bf16.mxu0 0
    %178 = vmatpush1.bf16.msra.mxu0 0
    %179 = vmatprep.subr.bf16.mxu0 0
    %180 = vmatpush1.bf16.msra.mxu0 0
    %181 = vmatprep.subr.bf16.mxu0 0
    %182 = vmatpush1.bf16.msra.mxu0 0
    %183 = vmatprep.subr.bf16.mxu0 0
    %184 = vmatpush1.bf16.msra.mxu0 0
    %185 = vmatprep.subr.bf16.mxu0 0
    %186 = vmatpush1.bf16.msra.mxu0 0
    %187 = vmatprep.subr.bf16.mxu0 0
    %188 = vmatpush1.bf16.msra.mxu0 0
    %189 = vmatprep.subr.bf16.mxu0 0
    %190 = vmatpush1.bf16.msra.mxu0 0
    %191 = vmatprep.subr.bf16.mxu0 0
    %192 = vmatpush1.bf16.msra.mxu0 0
    %193 = vmatprep.mubr.bf16.mxu0 0
    %194 = vmatmul.mubr.bf16.gmra.mrb[0].mxu0 %v108
    %v195 = vpop.f32.mrb[0].mxu0
    %v196 = vadd.f32 %v112, %v195
    %v197 = vpop.f32.mrb[0].mxu0
    %v198 = vpop.f32.mrb[0].mxu0
    %v199 = vadd.f32 %v112, %v198
    %v200 = vpop.f32.mrb[0].mxu0
    %201 = vdwg.mxu0
    %v202 = vld [vmem:[%s2] sm:$0xf]
    %v203 = vld [vmem:[%s2 + $0x4] sm:$0xf]
    %v204 = vld [vmem:[%s2 + $0x8] sm:$0xf]
    %v205 = vld [vmem:[%s2 + $0xc] sm:$0xf]
    %v206 = vld [vmem:[%s2 + $0x10] sm:$0xf]
    %v207 = vld [vmem:[%s2 + $0x14] sm:$0xf]
    %v208 = vld [vmem:[%s2 + $0x18] sm:$0xf]
    %v209 = vld [vmem:[%s2 + $0x1c] sm:$0xf]
    %v210 = vld [vmem:[%s3] sm:$0xf]
    %v211 = vld [vmem:[%s3 + $0x4] sm:$0xf]
    %v212 = vld [vmem:[#allocation2] sm:$0xff]
    %v213 = vld [vmem:[#allocation2 + $0x8] sm:$0xff]
    %v214 = vld [vmem:[#allocation2 + $0x10] sm:$0xff]
    %v215 = vld [vmem:[#allocation2 + $0x18] sm:$0xff]
    %v216 = vld [vmem:[#allocation2 + $0x20] sm:$0xff]
    %v217 = vld [vmem:[#allocation2 + $0x28] sm:$0xff]
    %v218 = vld [vmem:[#allocation2 + $0x30] sm:$0xff]
    %v219 = vld [vmem:[#allocation2 + $0x38] sm:$0xff]
    %v220 = vld [vmem:[#allocation2 + $0x40] sm:$0xff]
    %v221 = vld [vmem:[#allocation2 + $0x48] sm:$0xff]
    %v222 = vld [vmem:[#allocation2 + $0x50] sm:$0xff]
    %v223 = vld [vmem:[#allocation2 + $0x58] sm:$0xff]
    %v224 = vld [vmem:[#allocation2 + $0x60] sm:$0xff]
    %v225 = vld [vmem:[#allocation2 + $0x68] sm:$0xff]
    %v226 = vld [vmem:[#allocation2 + $0x70] sm:$0xff]
    %v227 = vld [vmem:[#allocation2 + $0x78] sm:$0xff]
    %v228 = vld [vmem:[#allocation2 + $0x80] sm:$0xff]
    %v229 = vld [vmem:[#allocation2 + $0x88] sm:$0xff]
    %v230 = vld [vmem:[#allocation2 + $0x90] sm:$0xff]
    %v231 = vld [vmem:[#allocation2 + $0x98] sm:$0xff]
    %v232 = vld [vmem:[#allocation2 + $0xa0] sm:$0xff]
    %v233 = vld [vmem:[#allocation2 + $0xa8] sm:$0xff]
    %v234 = vld [vmem:[#allocation2 + $0xb0] sm:$0xff]
    %v235 = vld [vmem:[#allocation2 + $0xb8] sm:$0xff]
    %v236 = vld [vmem:[#allocation2 + $0xc0] sm:$0xff]
    %v237 = vld [vmem:[#allocation2 + $0xc8] sm:$0xff]
    %v238 = vld [vmem:[#allocation2 + $0xd0] sm:$0xff]
    %v239 = vld [vmem:[#allocation2 + $0xd8] sm:$0xff]
    %v240 = vld [vmem:[#allocation2 + $0xe0] sm:$0xff]
    %v241 = vld [vmem:[#allocation2 + $0xe8] sm:$0xff]
    %v242 = vld [vmem:[#allocation2 + $0xf0] sm:$0xff]
    %v243 = vld [vmem:[#allocation2 + $0xf8] sm:$0xff]
    %v244 = vld [vmem:[#allocation5] sm:$0xf]
    %v245 = vld [vmem:[#allocation5 + $0x4] sm:$0xf]
    %v246 = vld [vmem:[#allocation5 + $0x8] sm:$0xf]
    %v247 = vld [vmem:[#allocation5 + $0xc] sm:$0xf]
    %v248 = vld [vmem:[#allocation5 + $0x10] sm:$0xf]
    %v249 = vld [vmem:[#allocation5 + $0x14] sm:$0xf]
    %v250 = vld [vmem:[#allocation5 + $0x18] sm:$0xf]
    %v251 = vld [vmem:[#allocation5 + $0x1c] sm:$0xf]
    %v252 = vld [vmem:[#allocation5 + $0x20] sm:$0xf]
    %v253 = vld [vmem:[#allocation5 + $0x24] sm:$0xf]
    %v254 = vld [vmem:[#allocation5 + $0x28] sm:$0xf]
    %v255 = vld [vmem:[#allocation5 + $0x2c] sm:$0xf]
    %v256 = vld [vmem:[#allocation5 + $0x30] sm:$0xf]
    %v257 = vld [vmem:[#allocation5 + $0x34] sm:$0xf]
    %v258 = vld [vmem:[#allocation5 + $0x38] sm:$0xf]
    %v259 = vld [vmem:[#allocation5 + $0x3c] sm:$0xf]
    %v260 = vld [vmem:[#allocation5 + $0x40] sm:$0xf]
    %v261 = vld [vmem:[#allocation5 + $0x44] sm:$0xf]
    %v262 = vld [vmem:[#allocation5 + $0x48] sm:$0xf]
    %v263 = vld [vmem:[#allocation5 + $0x4c] sm:$0xf]
    %v264 = vld [vmem:[#allocation5 + $0x50] sm:$0xf]
    %v265 = vld [vmem:[#allocation5 + $0x54] sm:$0xf]
    %v266 = vld [vmem:[#allocation5 + $0x58] sm:$0xf]
    %v267 = vld [vmem:[#allocation5 + $0x5c] sm:$0xf]
    %v268 = vld [vmem:[#allocation5 + $0x60] sm:$0xf]
    %v269 = vld [vmem:[#allocation5 + $0x64] sm:$0xf]
    %v270 = vld [vmem:[#allocation5 + $0x68] sm:$0xf]
    %v271 = vld [vmem:[#allocation5 + $0x6c] sm:$0xf]
    %v272 = vld [vmem:[#allocation5 + $0x70] sm:$0xf]
    %v273 = vld [vmem:[#allocation5 + $0x74] sm:$0xf]
    %v274 = vld [vmem:[#allocation5 + $0x78] sm:$0xf]
    %v275 = vld [vmem:[#allocation5 + $0x7c] sm:$0xf]
    %v276 = vld [vmem:[#allocation5 + $0x80] sm:$0xf]
    %v277 = vld [vmem:[#allocation5 + $0x84] sm:$0xf]
    %v278 = vld [vmem:[#allocation5 + $0x88] sm:$0xf]
    %v279 = vld [vmem:[#allocation5 + $0x8c] sm:$0xf]
    %v280 = vld [vmem:[#allocation5 + $0x90] sm:$0xf]
    %v281 = vld [vmem:[#allocation5 + $0x94] sm:$0xf]
    %v282 = vld [vmem:[#allocation5 + $0x98] sm:$0xf]
    %v283 = vld [vmem:[#allocation5 + $0x9c] sm:$0xf]
    %v284 = vld [vmem:[#allocation5 + $0xa0] sm:$0xf]
    %v285 = vld [vmem:[#allocation5 + $0xa4] sm:$0xf]
    %v286 = vld [vmem:[#allocation5 + $0xa8] sm:$0xf]
    %v287 = vld [vmem:[#allocation5 + $0xac] sm:$0xf]
    %v288 = vld [vmem:[#allocation5 + $0xb0] sm:$0xf]
    %v289 = vld [vmem:[#allocation5 + $0xb4] sm:$0xf]
    %v290 = vld [vmem:[#allocation5 + $0xb8] sm:$0xf]
    %v291 = vld [vmem:[#allocation5 + $0xbc] sm:$0xf]
    %v292 = vld [vmem:[#allocation5 + $0xc0] sm:$0xf]
    %v293 = vld [vmem:[#allocation5 + $0xc4] sm:$0xf]
    %v294 = vld [vmem:[#allocation5 + $0xc8] sm:$0xf]
    %v295 = vld [vmem:[#allocation5 + $0xcc] sm:$0xf]
    %v296 = vld [vmem:[#allocation5 + $0xd0] sm:$0xf]
    %v297 = vld [vmem:[#allocation5 + $0xd4] sm:$0xf]
    %v298 = vld [vmem:[#allocation5 + $0xd8] sm:$0xf]
    %v299 = vld [vmem:[#allocation5 + $0xdc] sm:$0xf]
    %v300 = vld [vmem:[#allocation5 + $0xe0] sm:$0xf]
    %v301 = vld [vmem:[#allocation5 + $0xe4] sm:$0xf]
    %v302 = vld [vmem:[#allocation5 + $0xe8] sm:$0xf]
    %v303 = vld [vmem:[#allocation5 + $0xec] sm:$0xf]
    %v304 = vld [vmem:[#allocation5 + $0xf0] sm:$0xf]
    %v305 = vld [vmem:[#allocation5 + $0xf4] sm:$0xf]
    %v306 = vld [vmem:[#allocation5 + $0xf8] sm:$0xf]
    %v307 = vld [vmem:[#allocation5 + $0xfc] sm:$0xf]
    %v308 = vld [vmem:[%s7] sm:$0xf]
    %309 = vadd.xlane.f32.xlu0 %v196
    %v310 = vpop.xlane.xlu0 %309
    %311 = vadd.xlane.f32.xlu0 %v199
    %v312 = vpop.xlane.xlu0 %311
    %v313 = vmul.f32 %v196, %v196
    %v314 = vmul.f32 %v199, %v199
    %315 = vadd.xlane.f32.xlu0 %v313
    %v316 = vpop.xlane.xlu0 %315
    %317 = vadd.xlane.f32.xlu0 %v314
    %v318 = vpop.xlane.xlu0 %317
    %v319 = vmul.f32 %v310, 0.0078125
    %v320 = vmul.f32 %v312, 0.0078125
    %v321 = vmul.f32 %v316, 0.0078125
    %v322 = vmul.f32 %v318, 0.0078125
    %v323 = vmul.f32 %v319, %v319
    %v324 = vmul.f32 %v320, %v320
    %v325 = vsub.f32 %v321, %v323
    %v326 = vsub.f32 %v322, %v324
    %v327 = vsub.f32 %v196, %v319
    %v328 = vsub.f32 %v199, %v320
    %v329 = vadd.f32 %v325, 1e-05
    %v330 = vadd.f32 %v326, 1e-05
    %v331 = vrsqrt.pop %v329
    %v332 = vrsqrt.pop %v330
    %v333 = vmul.f32 %v327, %v331
    %v334 = vmul.f32 %v328, %v332
    %v335 = vlaneseq
    %v336 = vshrl.u32 %v335, 7
    %v337 = vsub.s32 3, %v336
    %v338 = vrot.slane %v70, %v337
    %v339 = vmul.f32 %v333, %v338
    %v340 = vmul.f32 %v334, %v338
    %v341 = vlaneseq
    %v342 = vshrl.u32 %v341, 7
    %v343 = vsub.s32 4, %v342
    %v344 = vrot.slane %v70, %v343
    %v345 = vadd.f32 %v339, %v344
    %v346 = vadd.f32 %v340, %v344
    %v347 = vpack.c.bf16 %v346, %v345
    %349 = vset.pattern.permute.xlu0 0
    %350 = vperm.xlu0 %349, %v72
    %v351 = vpop.permute.xlu0 %350
    %354 = vset.pattern.permute.xlu0 0
    %355 = vperm.xlu0 %354, %v73
    %v356 = vpop.permute.xlu0 %355
    %359 = vset.pattern.permute.xlu0 0
    %360 = vperm.xlu0 %359, %v74
    %v361 = vpop.permute.xlu0 %360
    %364 = vset.pattern.permute.xlu0 0
    %365 = vperm.xlu0 %364, %v75
    %v366 = vpop.permute.xlu0 %365
    %369 = vset.pattern.permute.xlu0 0
    %370 = vperm.xlu0 %369, %v76
    %v371 = vpop.permute.xlu0 %370
    %374 = vset.pattern.permute.xlu0 0
    %375 = vperm.xlu0 %374, %v77
    %v376 = vpop.permute.xlu0 %375
    %379 = vset.pattern.permute.xlu0 0
    %380 = vperm.xlu0 %379, %v78
    %v381 = vpop.permute.xlu0 %380
    %384 = vset.pattern.permute.xlu0 0
    %385 = vperm.xlu0 %384, %v79
    %v386 = vpop.permute.xlu0 %385
    %v396 = vunpack.c.l.b16 %v202
    %v397 = vunpack.c.l.b16 %v203
    %v398 = vunpack.c.l.b16 %v204
    %v399 = vunpack.c.l.b16 %v205
    %v400 = vunpack.c.l.b16 %v206
    %v401 = vunpack.c.l.b16 %v207
    %v402 = vunpack.c.l.b16 %v208
    %v403 = vunpack.c.l.b16 %v209
    %v404 = vpack.c.b16 %v397, %v396
    %v405 = vpack.c.b16 %v399, %v398
    %v406 = vpack.c.b16 %v401, %v400
    %v407 = vpack.c.b16 %v403, %v402
    %vm408 = vcmask 130048
    %v410 = vsel %vm408, %v404, 0
    %v413 = vsel %vm408, %v405, 0
    %v416 = vsel %vm408, %v406, 0
    %v419 = vsel %vm408, %v407, 0
    %421 = vmatprep.subr.bf16.mxu0 0
    %422 = vmatpush1.bf16.msra.mxu0 %v347
    %423 = vmatprep.subr.bf16.mxu0 0
    %424 = vmatpush1.bf16.msra.mxu0 0
    %425 = vmatprep.subr.bf16.mxu0 0
    %426 = vmatpush1.bf16.msra.mxu0 0
    %427 = vmatprep.subr.bf16.mxu0 0
    %428 = vmatpush1.bf16.msra.mxu0 0
    %429 = vmatprep.subr.bf16.mxu0 0
    %430 = vmatpush1.bf16.msra.mxu0 0
    %431 = vmatprep.subr.bf16.mxu0 0
    %432 = vmatpush1.bf16.msra.mxu0 0
    %433 = vmatprep.subr.bf16.mxu0 0
    %434 = vmatpush1.bf16.msra.mxu0 0
    %435 = vmatprep.subr.bf16.mxu0 0
    %436 = vmatpush1.bf16.msra.mxu0 0
    %437 = vmatprep.subr.bf16.mxu0 0
    %438 = vmatpush1.bf16.msra.mxu0 0
    %439 = vmatprep.subr.bf16.mxu0 0
    %440 = vmatpush1.bf16.msra.mxu0 0
    %441 = vmatprep.subr.bf16.mxu0 0
    %442 = vmatpush1.bf16.msra.mxu0 0
    %443 = vmatprep.subr.bf16.mxu0 0
    %444 = vmatpush1.bf16.msra.mxu0 0
    %445 = vmatprep.subr.bf16.mxu0 0
    %446 = vmatpush1.bf16.msra.mxu0 0
    %447 = vmatprep.subr.bf16.mxu0 0
    %448 = vmatpush1.bf16.msra.mxu0 0
    %449 = vmatprep.subr.bf16.mxu0 0
    %450 = vmatpush1.bf16.msra.mxu0 0
    %451 = vmatprep.subr.bf16.mxu0 0
    %452 = vmatpush1.bf16.msra.mxu0 0
    %453 = vmatprep.mubr.bf16.mxu0 0
    %454 = vmatmul.mubr.bf16.gmra.mrb[0].mxu0 %v410
    %v455 = vpop.f32.mrb[0].mxu0
    %v456 = vadd.f32 %v351, %v455
    %v457 = vpop.f32.mrb[0].mxu0
    %v458 = vpop.f32.mrb[0].mxu0
    %v459 = vadd.f32 %v356, %v458
    %v460 = vpop.f32.mrb[0].mxu0
    %461 = vmatprep.mubr.bf16.mxu0 0
    %462 = vmatmul.mubr.bf16.gmra.mrb[0].mxu0 %v413
    %v463 = vpop.f32.mrb[0].mxu0
    %v464 = vadd.f32 %v361, %v463
    %v465 = vpop.f32.mrb[0].mxu0
    %v466 = vpop.f32.mrb[0].mxu0
    %v467 = vadd.f32 %v366, %v466
    %v468 = vpop.f32.mrb[0].mxu0
    %469 = vmatprep.mubr.bf16.mxu0 0
    %470 = vmatmul.mubr.bf16.gmra.mrb[0].mxu0 %v416
    %v471 = vpop.f32.mrb[0].mxu0
    %v472 = vadd.f32 %v371, %v471
    %v473 = vpop.f32.mrb[0].mxu0
    %v474 = vpop.f32.mrb[0].mxu0
    %v475 = vadd.f32 %v376, %v474
    %v476 = vpop.f32.mrb[0].mxu0
    %477 = vmatprep.mubr.bf16.mxu0 0
    %478 = vmatmul.mubr.bf16.gmra.mrb[0].mxu0 %v419
    %v479 = vpop.f32.mrb[0].mxu0
    %v480 = vadd.f32 %v381, %v479
    %v481 = vpop.f32.mrb[0].mxu0
    %v482 = vpop.f32.mrb[0].mxu0
    %v483 = vadd.f32 %v386, %v482
    %v484 = vpop.f32.mrb[0].mxu0
    %485 = vdwg.mxu0
    %v486 = vmul.f32 %v456, 0.5
    %v487 = vmul.f32 %v459, 0.5
    %v488 = vmul.f32 %v464, 0.5
    %v489 = vmul.f32 %v467, 0.5
    %v490 = vmul.f32 %v472, 0.5
    %v491 = vmul.f32 %v475, 0.5
    %v492 = vmul.f32 %v480, 0.5
    %v493 = vmul.f32 %v483, 0.5
    %v494 = vmul.f32 %v456, 0.70710677
    %v495 = vmul.f32 %v459, 0.70710677
    %v496 = vmul.f32 %v464, 0.70710677
    %v497 = vmul.f32 %v467, 0.70710677
    %v498 = vmul.f32 %v472, 0.70710677
    %v499 = vmul.f32 %v475, 0.70710677
    %v500 = vmul.f32 %v480, 0.70710677
    %v501 = vmul.f32 %v483, 0.70710677
    %v502 = verf.f32.pop %v494
    %v503 = verf.f32.pop %v495
    %v504 = verf.f32.pop %v496
    %v505 = verf.f32.pop %v497
    %v506 = verf.f32.pop %v498
    %v507 = verf.f32.pop %v499
    %v508 = verf.f32.pop %v500
    %v509 = verf.f32.pop %v501
    %v510 = vadd.f32 %v502, 1.0
    %v511 = vadd.f32 %v503, 1.0
    %v512 = vadd.f32 %v504, 1.0
    %v513 = vadd.f32 %v505, 1.0
    %v514 = vadd.f32 %v506, 1.0
    %v515 = vadd.f32 %v507, 1.0
    %v516 = vadd.f32 %v508, 1.0
    %v517 = vadd.f32 %v509, 1.0
    %v518 = vmul.f32 %v486, %v510
    %v519 = vmul.f32 %v487, %v511
    %v520 = vmul.f32 %v488, %v512
    %v521 = vmul.f32 %v489, %v513
    %v522 = vmul.f32 %v490, %v514
    %v523 = vmul.f32 %v491, %v515
    %v524 = vmul.f32 %v492, %v516
    %v525 = vmul.f32 %v493, %v517
    %v526 = vpack.c.bf16 %v519, %v518
    %v527 = vpack.c.bf16 %v521, %v520
    %v528 = vpack.c.bf16 %v523, %v522
    %v529 = vpack.c.bf16 %v525, %v524
    %v532 = vunpack.c.l.b16 %v210
    %v533 = vunpack.c.l.b16 %v211
    %v534 = vpack.c.b16 %v533, %v532
    %vm535 = vcmask 523264
    %v537 = vsel %vm535, %v534, 0
    %539 = vmatprep.subr.bf16.mxu0 0
    %540 = vmatpush1.bf16.msra.mxu0 %v526
    %541 = vmatprep.subr.bf16.mxu0 0
    %542 = vmatpush1.bf16.msra.mxu0 %v527
    %543 = vmatprep.subr.bf16.mxu0 0
    %544 = vmatpush1.bf16.msra.mxu0 %v528
    %545 = vmatprep.subr.bf16.mxu0 0
    %546 = vmatpush1.bf16.msra.mxu0 %v529
    %547 = vmatprep.subr.bf16.mxu0 0
    %548 = vmatpush1.bf16.msra.mxu0 0
    %549 = vmatprep.subr.bf16.mxu0 0
    %550 = vmatpush1.bf16.msra.mxu0 0
    %551 = vmatprep.subr.bf16.mxu0 0
    %552 = vmatpush1.bf16.msra.mxu0 0
    %553 = vmatprep.subr.bf16.mxu0 0
    %554 = vmatpush1.bf16.msra.mxu0 0
    %555 = vmatprep.subr.bf16.mxu0 0
    %556 = vmatpush1.bf16.msra.mxu0 0
    %557 = vmatprep.subr.bf16.mxu0 0
    %558 = vmatpush1.bf16.msra.mxu0 0
    %559 = vmatprep.subr.bf16.mxu0 0
    %560 = vmatpush1.bf16.msra.mxu0 0
    %561 = vmatprep.subr.bf16.mxu0 0
    %562 = vmatpush1.bf16.msra.mxu0 0
    %563 = vmatprep.subr.bf16.mxu0 0
    %564 = vmatpush1.bf16.msra.mxu0 0
    %565 = vmatprep.subr.bf16.mxu0 0
    %566 = vmatpush1.bf16.msra.mxu0 0
    %567 = vmatprep.subr.bf16.mxu0 0
    %568 = vmatpush1.bf16.msra.mxu0 0
    %569 = vmatprep.subr.bf16.mxu0 0
    %570 = vmatpush1.bf16.msra.mxu0 0
    %571 = vmatprep.mubr.bf16.mxu0 0
    %572 = vmatmul.mubr.bf16.gmra.mrb[0].mxu0 %v537
    %v573 = vpop.f32.mrb[0].mxu0
    %v574 = vadd.f32 0.0, %v573
    %v575 = vpop.f32.mrb[0].mxu0
    %v576 = vpop.f32.mrb[0].mxu0
    %v577 = vadd.f32 0.0, %v576
    %v578 = vpop.f32.mrb[0].mxu0
    %579 = vdwg.mxu0
    %v580 = vadd.f32 %v196, %v574
    %v581 = vadd.f32 %v199, %v577
    %583 = vset.pattern.permute.xlu0 0
    %584 = vperm.xlu0 %583, %v80
    %v585 = vpop.permute.xlu0 %584
    %588 = vset.pattern.permute.xlu0 0
    %589 = vperm.xlu0 %588, %v81
    %v590 = vpop.permute.xlu0 %589
    %v592 = vadd.f32 %v580, %v585
    %v593 = vadd.f32 %v581, %v590
    %594 = vadd.xlane.f32.xlu0 %v592
    %v595 = vpop.xlane.xlu0 %594
    %596 = vadd.xlane.f32.xlu0 %v593
    %v597 = vpop.xlane.xlu0 %596
    %v598 = vmul.f32 %v592, %v592
    %v599 = vmul.f32 %v593, %v593
    %600 = vadd.xlane.f32.xlu0 %v598
    %v601 = vpop.xlane.xlu0 %600
    %602 = vadd.xlane.f32.xlu0 %v599
    %v603 = vpop.xlane.xlu0 %602
    %v604 = vmul.f32 %v595, 0.0078125
    %v605 = vmul.f32 %v597, 0.0078125
    %v606 = vmul.f32 %v601, 0.0078125
    %v607 = vmul.f32 %v603, 0.0078125
    %v608 = vmul.f32 %v604, %v604
    %v609 = vmul.f32 %v605, %v605
    %v610 = vsub.f32 %v606, %v608
    %v611 = vsub.f32 %v607, %v609
    %v612 = vsub.f32 %v592, %v604
    %v613 = vsub.f32 %v593, %v605
    %v614 = vadd.f32 %v610, 1e-05
    %v615 = vadd.f32 %v611, 1e-05
    %v616 = vrsqrt.pop %v614
    %v617 = vrsqrt.pop %v615
    %v618 = vmul.f32 %v612, %v616
    %v619 = vmul.f32 %v613, %v617
    %v620 = vlaneseq
    %v621 = vshrl.u32 %v620, 7
    %v622 = vsub.s32 5, %v621
    %v623 = vrot.slane %v70, %v622
    %v624 = vmul.f32 %v618, %v623
    %v625 = vmul.f32 %v619, %v623
    %v626 = vlaneseq
    %v627 = vshrl.u32 %v626, 7
    %v628 = vsub.s32 6, %v627
    %v629 = vrot.slane %v70, %v628
    %v630 = vadd.f32 %v624, %v629
    %v631 = vadd.f32 %v625, %v629
    %v632 = vpack.c.bf16 %v631, %v630
    %v634 = vlaneseq
    %v635 = vshrl.u32 %v634, 7
    %v636 = vsub.s32 0, %v635
    %v637 = vrot.slane %v308, %v636
    %v638 = vlaneseq
    %v639 = vshrl.u32 %v638, 7
    %v640 = vsub.s32 1, %v639
    %v641 = vrot.slane %v308, %v640
    %v642 = vlaneseq
    %v643 = vshrl.u32 %v642, 7
    %v644 = vsub.s32 2, %v643
    %v645 = vrot.slane %v308, %v644
    %v646 = vlaneseq
    %v647 = vshrl.u32 %v646, 7
    %v648 = vsub.s32 3, %v647
    %v649 = vrot.slane %v308, %v648
    %v686 = vunpack.c.l.b16 %v212
    %v687 = vunpack.c.h.b16 %v212
    %v688 = vunpack.c.l.b16 %v213
    %v689 = vunpack.c.h.b16 %v213
    %v690 = vunpack.c.l.b16 %v214
    %v691 = vunpack.c.h.b16 %v214
    %v692 = vunpack.c.l.b16 %v215
    %v693 = vunpack.c.h.b16 %v215
    %v694 = vunpack.c.l.b16 %v216
    %v695 = vunpack.c.h.b16 %v216
    %v696 = vunpack.c.l.b16 %v217
    %v697 = vunpack.c.h.b16 %v217
    %v698 = vunpack.c.l.b16 %v218
    %v699 = vunpack.c.h.b16 %v218
    %v700 = vunpack.c.l.b16 %v219
    %v701 = vunpack.c.h.b16 %v219
    %v702 = vunpack.c.l.b16 %v220
    %v703 = vunpack.c.h.b16 %v220
    %v704 = vunpack.c.l.b16 %v221
    %v705 = vunpack.c.h.b16 %v221
    %v706 = vunpack.c.l.b16 %v222
    %v707 = vunpack.c.h.b16 %v222
    %v708 = vunpack.c.l.b16 %v223
    %v709 = vunpack.c.h.b16 %v223
    %v710 = vunpack.c.l.b16 %v224
    %v711 = vunpack.c.h.b16 %v224
    %v712 = vunpack.c.l.b16 %v225
    %v713 = vunpack.c.h.b16 %v225
    %v714 = vunpack.c.l.b16 %v226
    %v715 = vunpack.c.h.b16 %v226
    %v716 = vunpack.c.l.b16 %v227
    %v717 = vunpack.c.h.b16 %v227
    %v718 = vunpack.c.l.b16 %v228
    %v719 = vunpack.c.h.b16 %v228
    %v720 = vunpack.c.l.b16 %v229
    %v721 = vunpack.c.h.b16 %v229
    %v722 = vunpack.c.l.b16 %v230
    %v723 = vunpack.c.h.b16 %v230
    %v724 = vunpack.c.l.b16 %v231
    %v725 = vunpack.c.h.b16 %v231
    %v726 = vunpack.c.l.b16 %v232
    %v727 = vunpack.c.h.b16 %v232
    %v728 = vunpack.c.l.b16 %v233
    %v729 = vunpack.c.h.b16 %v233
    %v730 = vunpack.c.l.b16 %v234
    %v731 = vunpack.c.h.b16 %v234
    %v732 = vunpack.c.l.b16 %v235
    %v733 = vunpack.c.h.b16 %v235
    %v734 = vunpack.c.l.b16 %v236
    %v735 = vunpack.c.h.b16 %v236
    %v736 = vunpack.c.l.b16 %v237
    %v737 = vunpack.c.h.b16 %v237
    %v738 = vunpack.c.l.b16 %v238
    %v739 = vunpack.c.h.b16 %v238
    %v740 = vunpack.c.l.b16 %v239
    %v741 = vunpack.c.h.b16 %v239
    %v742 = vunpack.c.l.b16 %v240
    %v743 = vunpack.c.h.b16 %v240
    %v744 = vunpack.c.l.b16 %v241
    %v745 = vunpack.c.h.b16 %v241
    %v746 = vunpack.c.l.b16 %v242
    %v747 = vunpack.c.h.b16 %v242
    %v748 = vunpack.c.l.b16 %v243
    %v749 = vunpack.c.h.b16 %v243
    %v750 = vpack.c.b16 %v690, %v686
    %v751 = vpack.c.b16 %v691, %v687
    %v752 = vpack.c.b16 %v692, %v688
    %v753 = vpack.c.b16 %v693, %v689
    %v754 = vpack.c.b16 %v698, %v694
    %v755 = vpack.c.b16 %v699, %v695
    %v756 = vpack.c.b16 %v700, %v696
    %v757 = vpack.c.b16 %v701, %v697
    %v758 = vpack.c.b16 %v706, %v702
    %v759 = vpack.c.b16 %v707, %v703
    %v760 = vpack.c.b16 %v708, %v704
    %v761 = vpack.c.b16 %v709, %v705
    %v762 = vpack.c.b16 %v714, %v710
    %v763 = vpack.c.b16 %v715, %v711
    %v764 = vpack.c.b16 %v716, %v712
    %v765 = vpack.c.b16 %v717, %v713
    %v766 = vpack.c.b16 %v722, %v718
    %v767 = vpack.c.b16 %v723, %v719
    %v768 = vpack.c.b16 %v724, %v720
    %v769 = vpack.c.b16 %v725, %v721
    %v770 = vpack.c.b16 %v730, %v726
    %v771 = vpack.c.b16 %v731, %v727
    %v772 = vpack.c.b16 %v732, %v728
    %v773 = vpack.c.b16 %v733, %v729
    %v774 = vpack.c.b16 %v738, %v734
    %v775 = vpack.c.b16 %v739, %v735
    %v776 = vpack.c.b16 %v740, %v736
    %v777 = vpack.c.b16 %v741, %v737
    %v778 = vpack.c.b16 %v746, %v742
    %v779 = vpack.c.b16 %v747, %v743
    %v780 = vpack.c.b16 %v748, %v744
    %v781 = vpack.c.b16 %v749, %v745
    %814 = vmatprep.subr.bf16.mxu0 %v751
    %815 = vmatpush1.bf16.msra.mxu0 %v750
    %816 = vmatprep.subr.bf16.mxu0 %v755
    %817 = vmatpush1.bf16.msra.mxu0 %v754
    %818 = vmatprep.subr.bf16.mxu0 %v759
    %819 = vmatpush1.bf16.msra.mxu0 %v758
    %820 = vmatprep.subr.bf16.mxu0 %v763
    %821 = vmatpush1.bf16.msra.mxu0 %v762
    %822 = vmatprep.subr.bf16.mxu0 %v767
    %823 = vmatpush1.bf16.msra.mxu0 %v766
    %824 = vmatprep.subr.bf16.mxu0 %v771
    %825 = vmatpush1.bf16.msra.mxu0 %v770
    %826 = vmatprep.subr.bf16.mxu0 %v775
    %827 = vmatpush1.bf16.msra.mxu0 %v774
    %828 = vmatprep.subr.bf16.mxu0 %v779
    %829 = vmatpush1.bf16.msra.mxu0 %v778
    %830 = vmatprep.subr.bf16.mxu0 0
    %831 = vmatpush1.bf16.msra.mxu0 0
    %832 = vmatprep.subr.bf16.mxu0 0
    %833 = vmatpush1.bf16.msra.mxu0 0
    %834 = vmatprep.subr.bf16.mxu0 0
    %835 = vmatpush1.bf16.msra.mxu0 0
    %836 = vmatprep.subr.bf16.mxu0 0
    %837 = vmatpush1.bf16.msra.mxu0 0
    %838 = vmatprep.subr.bf16.mxu0 0
    %839 = vmatpush1.bf16.msra.mxu0 0
    %840 = vmatprep.subr.bf16.mxu0 0
    %841 = vmatpush1.bf16.msra.mxu0 0
    %842 = vmatprep.subr.bf16.mxu0 0
    %843 = vmatpush1.bf16.msra.mxu0 0
    %844 = vmatprep.subr.bf16.mxu0 0
    %845 = vmatpush1.bf16.msra.mxu0 0
    %846 = vmatprep.mubr.bf16.mxu0 0
    %847 = vmatmul.mubr.bf16.gmra.mrb[0].mxu0 %v632
    %v848 = vpop.f32.mrb[0].mxu0
    %v849 = vadd.f32 %v637, %v848
    %v850 = vpop.f32.mrb[0].mxu0
    %v851 = vadd.f32 %v641, %v850
    %v852 = vpop.f32.mrb[0].mxu0
    %v853 = vadd.f32 %v637, %v852
    %v854 = vpop.f32.mrb[0].mxu0
    %v855 = vadd.f32 %v641, %v854
    %856 = vdwg.mxu0
    %857 = vmatprep.subr.bf16.mxu0 %v753
    %858 = vmatpush1.bf16.msra.mxu0 %v752
    %859 = vmatprep.subr.bf16.mxu0 %v757
    %860 = vmatpush1.bf16.msra.mxu0 %v756
    %861 = vmatprep.subr.bf16.mxu0 %v761
    %862 = vmatpush1.bf16.msra.mxu0 %v760
    %863 = vmatprep.subr.bf16.mxu0 %v765
    %864 = vmatpush1.bf16.msra.mxu0 %v764
    %865 = vmatprep.subr.bf16.mxu0 %v769
    %866 = vmatpush1.bf16.msra.mxu0 %v768
    %867 = vmatprep.subr.bf16.mxu0 %v773
    %868 = vmatpush1.bf16.msra.mxu0 %v772
    %869 = vmatprep.subr.bf16.mxu0 %v777
    %870 = vmatpush1.bf16.msra.mxu0 %v776
    %871 = vmatprep.subr.bf16.mxu0 %v781
    %872 = vmatpush1.bf16.msra.mxu0 %v780
    %873 = vmatprep.subr.bf16.mxu0 0
    %874 = vmatpush1.bf16.msra.mxu0 0
    %875 = vmatprep.subr.bf16.mxu0 0
    %876 = vmatpush1.bf16.msra.mxu0 0
    %877 = vmatprep.subr.bf16.mxu0 0
    %878 = vmatpush1.bf16.msra.mxu0 0
    %879 = vmatprep.subr.bf16.mxu0 0
    %880 = vmatpush1.bf16.msra.mxu0 0
    %881 = vmatprep.subr.bf16.mxu0 0
    %882 = vmatpush1.bf16.msra.mxu0 0
    %883 = vmatprep.subr.bf16.mxu0 0
    %884 = vmatpush1.bf16.msra.mxu0 0
    %885 = vmatprep.subr.bf16.mxu0 0
    %886 = vmatpush1.bf16.msra.mxu0 0
    %887 = vmatprep.subr.bf16.mxu0 0
    %888 = vmatpush1.bf16.msra.mxu0 0
    %889 = vmatprep.mubr.bf16.mxu0 0
    %890 = vmatmul.mubr.bf16.gmra.mrb[0].mxu0 %v632
    %v891 = vpop.f32.mrb[0].mxu0
    %v892 = vadd.f32 %v645, %v891
    %v893 = vpop.f32.mrb[0].mxu0
    %v894 = vadd.f32 %v649, %v893
    %v895 = vpop.f32.mrb[0].mxu0
    %v896 = vadd.f32 %v645, %v895
    %v897 = vpop.f32.mrb[0].mxu0
    %v898 = vadd.f32 %v649, %v897
    %899 = vdwg.mxu0
    %v900 = vmul.f32 %v849, 0.5
    %v901 = vmul.f32 %v851, 0.5
    %v902 = vmul.f32 %v892, 0.5
    %v903 = vmul.f32 %v894, 0.5
    %v904 = vmul.f32 %v853, 0.5
    %v905 = vmul.f32 %v855, 0.5
    %v906 = vmul.f32 %v896, 0.5
    %v907 = vmul.f32 %v898, 0.5
    %v908 = vmul.f32 %v849, 0.70710677
    %v909 = vmul.f32 %v851, 0.70710677
    %v910 = vmul.f32 %v892, 0.70710677
    %v911 = vmul.f32 %v894, 0.70710677
    %v912 = vmul.f32 %v853, 0.70710677
    %v913 = vmul.f32 %v855, 0.70710677
    %v914 = vmul.f32 %v896, 0.70710677
    %v915 = vmul.f32 %v898, 0.70710677
    %v916 = verf.f32.pop %v908
    %v917 = verf.f32.pop %v909
    %v918 = verf.f32.pop %v910
    %v919 = verf.f32.pop %v911
    %v920 = verf.f32.pop %v912
    %v921 = verf.f32.pop %v913
    %v922 = verf.f32.pop %v914
    %v923 = verf.f32.pop %v915
    %v924 = vadd.f32 %v916, 1.0
    %v925 = vadd.f32 %v917, 1.0
    %v926 = vadd.f32 %v918, 1.0
    %v927 = vadd.f32 %v919, 1.0
    %v928 = vadd.f32 %v920, 1.0
    %v929 = vadd.f32 %v921, 1.0
    %v930 = vadd.f32 %v922, 1.0
    %v931 = vadd.f32 %v923, 1.0
    %v932 = vmul.f32 %v900, %v924
    %v933 = vmul.f32 %v901, %v925
    %v934 = vmul.f32 %v902, %v926
    %v935 = vmul.f32 %v903, %v927
    %v936 = vmul.f32 %v904, %v928
    %v937 = vmul.f32 %v905, %v929
    %v938 = vmul.f32 %v906, %v930
    %v939 = vmul.f32 %v907, %v931
    %v940 = vpack.c.bf16 %v936, %v932
    %v941 = vpack.c.bf16 %v937, %v933
    %v942 = vpack.c.bf16 %v938, %v934
    %v943 = vpack.c.bf16 %v939, %v935
    %v1008 = vunpack.c.l.b16 %v244
    %v1009 = vunpack.c.l.b16 %v245
    %v1010 = vunpack.c.l.b16 %v246
    %v1011 = vunpack.c.l.b16 %v247
    %v1012 = vunpack.c.l.b16 %v248
    %v1013 = vunpack.c.l.b16 %v249
    %v1014 = vunpack.c.l.b16 %v250
    %v1015 = vunpack.c.l.b16 %v251
    %v1016 = vunpack.c.l.b16 %v252
    %v1017 = vunpack.c.l.b16 %v253
    %v1018 = vunpack.c.l.b16 %v254
    %v1019 = vunpack.c.l.b16 %v255
    %v1020 = vunpack.c.l.b16 %v256
    %v1021 = vunpack.c.l.b16 %v257
    %v1022 = vunpack.c.l.b16 %v258
    %v1023 = vunpack.c.l.b16 %v259
    %v1024 = vunpack.c.l.b16 %v260
    %v1025 = vunpack.c.l.b16 %v261
    %v1026 = vunpack.c.l.b16 %v262
    %v1027 = vunpack.c.l.b16 %v263
    %v1028 = vunpack.c.l.b16 %v264
    %v1029 = vunpack.c.l.b16 %v265
    %v1030 = vunpack.c.l.b16 %v266
    %v1031 = vunpack.c.l.b16 %v267
    %v1032 = vunpack.c.l.b16 %v268
    %v1033 = vunpack.c.l.b16 %v269
    %v1034 = vunpack.c.l.b16 %v270
    %v1035 = vunpack.c.l.b16 %v271
    %v1036 = vunpack.c.l.b16 %v272
    %v1037 = vunpack.c.l.b16 %v273
    %v1038 = vunpack.c.l.b16 %v274
    %v1039 = vunpack.c.l.b16 %v275
    %v1040 = vunpack.c.l.b16 %v276
    %v1041 = vunpack.c.l.b16 %v277
    %v1042 = vunpack.c.l.b16 %v278
    %v1043 = vunpack.c.l.b16 %v279
    %v1044 = vunpack.c.l.b16 %v280
    %v1045 = vunpack.c.l.b16 %v281
    %v1046 = vunpack.c.l.b16 %v282
    %v1047 = vunpack.c.l.b16 %v283
    %v1048 = vunpack.c.l.b16 %v284
    %v1049 = vunpack.c.l.b16 %v285
    %v1050 = vunpack.c.l.b16 %v286
    %v1051 = vunpack.c.l.b16 %v287
    %v1052 = vunpack.c.l.b16 %v288
    %v1053 = vunpack.c.l.b16 %v289
    %v1054 = vunpack.c.l.b16 %v290
    %v1055 = vunpack.c.l.b16 %v291
    %v1056 = vunpack.c.l.b16 %v292
    %v1057 = vunpack.c.l.b16 %v293
    %v1058 = vunpack.c.l.b16 %v294
    %v1059 = vunpack.c.l.b16 %v295
    %v1060 = vunpack.c.l.b16 %v296
    %v1061 = vunpack.c.l.b16 %v297
    %v1062 = vunpack.c.l.b16 %v298
    %v1063 = vunpack.c.l.b16 %v299
    %v1064 = vunpack.c.l.b16 %v300
    %v1065 = vunpack.c.l.b16 %v301
    %v1066 = vunpack.c.l.b16 %v302
    %v1067 = vunpack.c.l.b16 %v303
    %v1068 = vunpack.c.l.b16 %v304
    %v1069 = vunpack.c.l.b16 %v305
    %v1070 = vunpack.c.l.b16 %v306
    %v1071 = vunpack.c.l.b16 %v307
    %v1072 = vpack.c.b16 %v1009, %v1008
    %v1073 = vpack.c.b16 %v1011, %v1010
    %v1074 = vpack.c.b16 %v1013, %v1012
    %v1075 = vpack.c.b16 %v1015, %v1014
    %v1076 = vpack.c.b16 %v1017, %v1016
    %v1077 = vpack.c.b16 %v1019, %v1018
    %v1078 = vpack.c.b16 %v1021, %v1020
    %v1079 = vpack.c.b16 %v1023, %v1022
    %v1080 = vpack.c.b16 %v1025, %v1024
    %v1081 = vpack.c.b16 %v1027, %v1026
    %v1082 = vpack.c.b16 %v1029, %v1028
    %v1083 = vpack.c.b16 %v1031, %v1030
    %v1084 = vpack.c.b16 %v1033, %v1032
    %v1085 = vpack.c.b16 %v1035, %v1034
    %v1086 = vpack.c.b16 %v1037, %v1036
    %v1087 = vpack.c.b16 %v1039, %v1038
    %v1088 = vpack.c.b16 %v1041, %v1040
    %v1089 = vpack.c.b16 %v1043, %v1042
    %v1090 = vpack.c.b16 %v1045, %v1044
    %v1091 = vpack.c.b16 %v1047, %v1046
    %v1092 = vpack.c.b16 %v1049, %v1048
    %v1093 = vpack.c.b16 %v1051, %v1050
    %v1094 = vpack.c.b16 %v1053, %v1052
    %v1095 = vpack.c.b16 %v1055, %v1054
    %v1096 = vpack.c.b16 %v1057, %v1056
    %v1097 = vpack.c.b16 %v1059, %v1058
    %v1098 = vpack.c.b16 %v1061, %v1060
    %v1099 = vpack.c.b16 %v1063, %v1062
    %v1100 = vpack.c.b16 %v1065, %v1064
    %v1101 = vpack.c.b16 %v1067, %v1066
    %v1102 = vpack.c.b16 %v1069, %v1068
    %v1103 = vpack.c.b16 %v1071, %v1070
    %1136 = vmatprep.subr.bf16.mxu0 0
    %1137 = vmatpush1.bf16.msra.mxu0 %v1072
    %1138 = vmatprep.subr.bf16.mxu0 0
    %1139 = vmatpush1.bf16.msra.mxu0 %v1073
    %1140 = vmatprep.subr.bf16.mxu0 0
    %1141 = vmatpush1.bf16.msra.mxu0 %v1074
    %1142 = vmatprep.subr.bf16.mxu0 0
    %1143 = vmatpush1.bf16.msra.mxu0 %v1075
    %1144 = vmatprep.subr.bf16.mxu0 0
    %1145 = vmatpush1.bf16.msra.mxu0 %v1076
    %1146 = vmatprep.subr.bf16.mxu0 0
    %1147 = vmatpush1.bf16.msra.mxu0 %v1077
    %1148 = vmatprep.subr.bf16.mxu0 0
    %1149 = vmatpush1.bf16.msra.mxu0 %v1078
    %1150 = vmatprep.subr.bf16.mxu0 0
    %1151 = vmatpush1.bf16.msra.mxu0 %v1079
    %1152 = vmatprep.subr.bf16.mxu0 0
    %1153 = vmatpush1.bf16.msra.mxu0 %v1080
    %1154 = vmatprep.subr.bf16.mxu0 0
    %1155 = vmatpush1.bf16.msra.mxu0 %v1081
    %1156 = vmatprep.subr.bf16.mxu0 0
    %1157 = vmatpush1.bf16.msra.mxu0 %v1082
    %1158 = vmatprep.subr.bf16.mxu0 0
    %1159 = vmatpush1.bf16.msra.mxu0 %v1083
    %1160 = vmatprep.subr.bf16.mxu0 0
    %1161 = vmatpush1.bf16.msra.mxu0 %v1084
    %1162 = vmatprep.subr.bf16.mxu0 0
    %1163 = vmatpush1.bf16.msra.mxu0 %v1085
    %1164 = vmatprep.subr.bf16.mxu0 0
    %1165 = vmatpush1.bf16.msra.mxu0 %v1086
    %1166 = vmatprep.subr.bf16.mxu0 0
    %1167 = vmatpush1.bf16.msra.mxu0 %v1087
    %1168 = vmatprep.mubr.bf16.mxu0 %v941
    %1169 = vmatmul.mubr.bf16.gmra.mrb[0].mxu0 %v940
    %v1170 = vpop.f32.mrb[0].mxu0
    %v1171 = vadd.f32 0.0, %v1170
    %v1172 = vpop.f32.mrb[0].mxu0
    %v1173 = vpop.f32.mrb[0].mxu0
    %v1174 = vadd.f32 0.0, %v1173
    %v1175 = vpop.f32.mrb[0].mxu0
    %1176 = vdwg.mxu0
    %1177 = vmatprep.subr.bf16.mxu0 0
    %1178 = vmatpush1.bf16.msra.mxu0 %v1088
    %1179 = vmatprep.subr.bf16.mxu0 0
    %1180 = vmatpush1.bf16.msra.mxu0 %v1089
    %1181 = vmatprep.subr.bf16.mxu0 0
    %1182 = vmatpush1.bf16.msra.mxu0 %v1090
    %1183 = vmatprep.subr.bf16.mxu0 0
    %1184 = vmatpush1.bf16.msra.mxu0 %v1091
    %1185 = vmatprep.subr.bf16.mxu0 0
    %1186 = vmatpush1.bf16.msra.mxu0 %v1092
    %1187 = vmatprep.subr.bf16.mxu0 0
    %1188 = vmatpush1.bf16.msra.mxu0 %v1093
    %1189 = vmatprep.subr.bf16.mxu0 0
    %1190 = vmatpush1.bf16.msra.mxu0 %v1094
    %1191 = vmatprep.subr.bf16.mxu0 0
    %1192 = vmatpush1.bf16.msra.mxu0 %v1095
    %1193 = vmatprep.subr.bf16.mxu0 0
    %1194 = vmatpush1.bf16.msra.mxu0 %v1096
    %1195 = vmatprep.subr.bf16.mxu0 0
    %1196 = vmatpush1.bf16.msra.mxu0 %v1097
    %1197 = vmatprep.subr.bf16.mxu0 0
    %1198 = vmatpush1.bf16.msra.mxu0 %v1098
    %1199 = vmatprep.subr.bf16.mxu0 0
    %1200 = vmatpush1.bf16.msra.mxu0 %v1099
    %1201 = vmatprep.subr.bf16.mxu0 0
    %1202 = vmatpush1.bf16.msra.mxu0 %v1100
    %1203 = vmatprep.subr.bf16.mxu0 0
    %1204 = vmatpush1.bf16.msra.mxu0 %v1101
    %1205 = vmatprep.subr.bf16.mxu0 0
    %1206 = vmatpush1.bf16.msra.mxu0 %v1102
    %1207 = vmatprep.subr.bf16.mxu0 0
    %1208 = vmatpush1.bf16.msra.mxu0 %v1103
    %1209 = vmatprep.mubr.bf16.mxu0 %v943
    %1210 = vmatmul.mubr.bf16.gmra.mrb[0].mxu0 %v942
    %v1211 = vpop.f32.mrb[0].mxu0
    %v1212 = vadd.f32 %v1171, %v1211
    %v1213 = vpop.f32.mrb[0].mxu0
    %v1214 = vpop.f32.mrb[0].mxu0
    %v1215 = vadd.f32 %v1174, %v1214
    %v1216 = vpop.f32.mrb[0].mxu0
    %1217 = vdwg.mxu0
    %v1218 = vadd.f32 %v592, %v1212
    %v1219 = vadd.f32 %v593, %v1215
    %v1220 = vlaneseq
    %v1221 = vshrl.u32 %v1220, 7
    %v1222 = vsub.s32 7, %v1221
    %v1223 = vrot.slane %v70, %v1222
    %v1224 = vadd.f32 %v1218, %v1223
    %v1225 = vadd.f32 %v1219, %v1223
    %s1226 = scalar_lea.vmem %s2, 32
    %v1227 = vld [vmem:[%s1226] sm:$0xf]
    %v1228 = vld [vmem:[%s1226 + $0x4] sm:$0xf]
    %v1229 = vld [vmem:[%s1226 + $0x8] sm:$0xf]
    %v1230 = vld [vmem:[%s1226 + $0xc] sm:$0xf]
    %v1231 = vld [vmem:[%s1226 + $0x10] sm:$0xf]
    %v1232 = vld [vmem:[%s1226 + $0x14] sm:$0xf]
    %v1233 = vld [vmem:[%s1226 + $0x18] sm:$0xf]
    %v1234 = vld [vmem:[%s1226 + $0x1c] sm:$0xf]
    %s1235 = scalar_lea.vmem %s3, 8
    %v1236 = vld [vmem:[%s1235] sm:$0xf]
    %v1237 = vld [vmem:[%s1235 + $0x4] sm:$0xf]
    %s1238 = scalar_lea.vmem [#allocation2], 256
    %v1239 = vld [vmem:[%s1238] sm:$0xff]
    %v1240 = vld [vmem:[%s1238 + $0x8] sm:$0xff]
    %v1241 = vld [vmem:[%s1238 + $0x10] sm:$0xff]
    %v1242 = vld [vmem:[%s1238 + $0x18] sm:$0xff]
    %v1243 = vld [vmem:[%s1238 + $0x20] sm:$0xff]
    %v1244 = vld [vmem:[%s1238 + $0x28] sm:$0xff]
    %v1245 = vld [vmem:[%s1238 + $0x30] sm:$0xff]
    %v1246 = vld [vmem:[%s1238 + $0x38] sm:$0xff]
    %v1247 = vld [vmem:[%s1238 + $0x40] sm:$0xff]
    %v1248 = vld [vmem:[%s1238 + $0x48] sm:$0xff]
    %v1249 = vld [vmem:[%s1238 + $0x50] sm:$0xff]
    %v1250 = vld [vmem:[%s1238 + $0x58] sm:$0xff]
    %v1251 = vld [vmem:[%s1238 + $0x60] sm:$0xff]
    %v1252 = vld [vmem:[%s1238 + $0x68] sm:$0xff]
    %v1253 = vld [vmem:[%s1238 + $0x70] sm:$0xff]
    %v1254 = vld [vmem:[%s1238 + $0x78] sm:$0xff]
    %v1255 = vld [vmem:[%s1238 + $0x80] sm:$0xff]
    %v1256 = vld [vmem:[%s1238 + $0x88] sm:$0xff]
    %v1257 = vld [vmem:[%s1238 + $0x90] sm:$0xff]
    %v1258 = vld [vmem:[%s1238 + $0x98] sm:$0xff]
    %v1259 = vld [vmem:[%s1238 + $0xa0] sm:$0xff]
    %v1260 = vld [vmem:[%s1238 + $0xa8] sm:$0xff]
    %v1261 = vld [vmem:[%s1238 + $0xb0] sm:$0xff]
    %v1262 = vld [vmem:[%s1238 + $0xb8] sm:$0xff]
    %v1263 = vld [vmem:[%s1238 + $0xc0] sm:$0xff]
    %v1264 = vld [vmem:[%s1238 + $0xc8] sm:$0xff]
    %v1265 = vld [vmem:[%s1238 + $0xd0] sm:$0xff]
    %v1266 = vld [vmem:[%s1238 + $0xd8] sm:$0xff]
    %v1267 = vld [vmem:[%s1238 + $0xe0] sm:$0xff]
    %v1268 = vld [vmem:[%s1238 + $0xe8] sm:$0xff]
    %v1269 = vld [vmem:[%s1238 + $0xf0] sm:$0xff]
    %v1270 = vld [vmem:[%s1238 + $0xf8] sm:$0xff]
    %s1271 = scalar_lea.vmem [#allocation5], 256
    %v1272 = vld [vmem:[%s1271] sm:$0xf]
    %v1273 = vld [vmem:[%s1271 + $0x4] sm:$0xf]
    %v1274 = vld [vmem:[%s1271 + $0x8] sm:$0xf]
    %v1275 = vld [vmem:[%s1271 + $0xc] sm:$0xf]
    %v1276 = vld [vmem:[%s1271 + $0x10] sm:$0xf]
    %v1277 = vld [vmem:[%s1271 + $0x14] sm:$0xf]
    %v1278 = vld [vmem:[%s1271 + $0x18] sm:$0xf]
    %v1279 = vld [vmem:[%s1271 + $0x1c] sm:$0xf]
    %v1280 = vld [vmem:[%s1271 + $0x20] sm:$0xf]
    %v1281 = vld [vmem:[%s1271 + $0x24] sm:$0xf]
    %v1282 = vld [vmem:[%s1271 + $0x28] sm:$0xf]
    %v1283 = vld [vmem:[%s1271 + $0x2c] sm:$0xf]
    %v1284 = vld [vmem:[%s1271 + $0x30] sm:$0xf]
    %v1285 = vld [vmem:[%s1271 + $0x34] sm:$0xf]
    %v1286 = vld [vmem:[%s1271 + $0x38] sm:$0xf]
    %v1287 = vld [vmem:[%s1271 + $0x3c] sm:$0xf]
    %v1288 = vld [vmem:[%s1271 + $0x40] sm:$0xf]
    %v1289 = vld [vmem:[%s1271 + $0x44] sm:$0xf]
    %v1290 = vld [vmem:[%s1271 + $0x48] sm:$0xf]
    %v1291 = vld [vmem:[%s1271 + $0x4c] sm:$0xf]
    %v1292 = vld [vmem:[%s1271 + $0x50] sm:$0xf]
    %v1293 = vld [vmem:[%s1271 + $0x54] sm:$0xf]
    %v1294 = vld [vmem:[%s1271 + $0x58] sm:$0xf]
    %v1295 = vld [vmem:[%s1271 + $0x5c] sm:$0xf]
    %v1296 = vld [vmem:[%s1271 + $0x60] sm:$0xf]
    %v1297 = vld [vmem:[%s1271 + $0x64] sm:$0xf]
    %v1298 = vld [vmem:[%s1271 + $0x68] sm:$0xf]
    %v1299 = vld [vmem:[%s1271 + $0x6c] sm:$0xf]
    %v1300 = vld [vmem:[%s1271 + $0x70] sm:$0xf]
    %v1301 = vld [vmem:[%s1271 + $0x74] sm:$0xf]
    %v1302 = vld [vmem:[%s1271 + $0x78] sm:$0xf]
    %v1303 = vld [vmem:[%s1271 + $0x7c] sm:$0xf]
    %v1304 = vld [vmem:[%s1271 + $0x80] sm:$0xf]
    %v1305 = vld [vmem:[%s1271 + $0x84] sm:$0xf]
    %v1306 = vld [vmem:[%s1271 + $0x88] sm:$0xf]
    %v1307 = vld [vmem:[%s1271 + $0x8c] sm:$0xf]
    %v1308 = vld [vmem:[%s1271 + $0x90] sm:$0xf]
    %v1309 = vld [vmem:[%s1271 + $0x94] sm:$0xf]
    %v1310 = vld [vmem:[%s1271 + $0x98] sm:$0xf]
    %v1311 = vld [vmem:[%s1271 + $0x9c] sm:$0xf]
    %v1312 = vld [vmem:[%s1271 + $0xa0] sm:$0xf]
    %v1313 = vld [vmem:[%s1271 + $0xa4] sm:$0xf]
    %v1314 = vld [vmem:[%s1271 + $0xa8] sm:$0xf]
    %v1315 = vld [vmem:[%s1271 + $0xac] sm:$0xf]
    %v1316 = vld [vmem:[%s1271 + $0xb0] sm:$0xf]
    %v1317 = vld [vmem:[%s1271 + $0xb4] sm:$0xf]
    %v1318 = vld [vmem:[%s1271 + $0xb8] sm:$0xf]
    %v1319 = vld [vmem:[%s1271 + $0xbc] sm:$0xf]
    %v1320 = vld [vmem:[%s1271 + $0xc0] sm:$0xf]
    %v1321 = vld [vmem:[%s1271 + $0xc4] sm:$0xf]
    %v1322 = vld [vmem:[%s1271 + $0xc8] sm:$0xf]
    %v1323 = vld [vmem:[%s1271 + $0xcc] sm:$0xf]
    %v1324 = vld [vmem:[%s1271 + $0xd0] sm:$0xf]
    %v1325 = vld [vmem:[%s1271 + $0xd4] sm:$0xf]
    %v1326 = vld [vmem:[%s1271 + $0xd8] sm:$0xf]
    %v1327 = vld [vmem:[%s1271 + $0xdc] sm:$0xf]
    %v1328 = vld [vmem:[%s1271 + $0xe0] sm:$0xf]
    %v1329 = vld [vmem:[%s1271 + $0xe4] sm:$0xf]
    %v1330 = vld [vmem:[%s1271 + $0xe8] sm:$0xf]
    %v1331 = vld [vmem:[%s1271 + $0xec] sm:$0xf]
    %v1332 = vld [vmem:[%s1271 + $0xf0] sm:$0xf]
    %v1333 = vld [vmem:[%s1271 + $0xf4] sm:$0xf]
    %v1334 = vld [vmem:[%s1271 + $0xf8] sm:$0xf]
    %v1335 = vld [vmem:[%s1271 + $0xfc] sm:$0xf]
    %s1336 = scalar_lea.vmem %s7, 4
    %v1337 = vld [vmem:[%s1336] sm:$0xf]
    %1338 = vadd.xlane.f32.xlu0 %v1224
    %v1339 = vpop.xlane.xlu0 %1338
    %1340 = vadd.xlane.f32.xlu0 %v1225
    %v1341 = vpop.xlane.xlu0 %1340
    %v1342 = vmul.f32 %v1224, %v1224
    %v1343 = vmul.f32 %v1225, %v1225
    %1344 = vadd.xlane.f32.xlu0 %v1342
    %v1345 = vpop.xlane.xlu0 %1344
    %1346 = vadd.xlane.f32.xlu0 %v1343
    %v1347 = vpop.xlane.xlu0 %1346
    %v1348 = vmul.f32 %v1339, 0.0078125
    %v1349 = vmul.f32 %v1341, 0.0078125
    %v1350 = vmul.f32 %v1345, 0.0078125
    %v1351 = vmul.f32 %v1347, 0.0078125
    %v1352 = vmul.f32 %v1348, %v1348
    %v1353 = vmul.f32 %v1349, %v1349
    %v1354 = vsub.f32 %v1350, %v1352
    %v1355 = vsub.f32 %v1351, %v1353
    %v1356 = vsub.f32 %v1224, %v1348
    %v1357 = vsub.f32 %v1225, %v1349
    %v1358 = vadd.f32 %v1354, 1e-05
    %v1359 = vadd.f32 %v1355, 1e-05
    %v1360 = vrsqrt.pop %v1358
    %v1361 = vrsqrt.pop %v1359
    %v1362 = vmul.f32 %v1356, %v1360
    %v1363 = vmul.f32 %v1357, %v1361
    %v1364 = vlaneseq
    %v1365 = vshrl.u32 %v1364, 7
    %v1366 = vsub.s32 0, %v1365
    %v1367 = vrot.slane %v71, %v1366
    %v1368 = vmul.f32 %v1362, %v1367
    %v1369 = vmul.f32 %v1363, %v1367
    %v1370 = vlaneseq
    %v1371 = vshrl.u32 %v1370, 7
    %v1372 = vsub.s32 1, %v1371
    %v1373 = vrot.slane %v71, %v1372
    %v1374 = vadd.f32 %v1368, %v1373
    %v1375 = vadd.f32 %v1369, %v1373
    %v1376 = vpack.c.bf16 %v1375, %v1374
    %1378 = vset.pattern.permute.xlu0 0
    %1379 = vperm.xlu0 %1378, %v82
    %v1380 = vpop.permute.xlu0 %1379
    %1383 = vset.pattern.permute.xlu0 0
    %1384 = vperm.xlu0 %1383, %v83
    %v1385 = vpop.permute.xlu0 %1384
    %1388 = vset.pattern.permute.xlu0 0
    %1389 = vperm.xlu0 %1388, %v84
    %v1390 = vpop.permute.xlu0 %1389
    %1393 = vset.pattern.permute.xlu0 0
    %1394 = vperm.xlu0 %1393, %v85
    %v1395 = vpop.permute.xlu0 %1394
    %1398 = vset.pattern.permute.xlu0 0
    %1399 = vperm.xlu0 %1398, %v86
    %v1400 = vpop.permute.xlu0 %1399
    %1403 = vset.pattern.permute.xlu0 0
    %1404 = vperm.xlu0 %1403, %v87
    %v1405 = vpop.permute.xlu0 %1404
    %1408 = vset.pattern.permute.xlu0 0
    %1409 = vperm.xlu0 %1408, %v88
    %v1410 = vpop.permute.xlu0 %1409
    %1413 = vset.pattern.permute.xlu0 0
    %1414 = vperm.xlu0 %1413, %v89
    %v1415 = vpop.permute.xlu0 %1414
    %v1425 = vunpack.c.l.b16 %v1227
    %v1426 = vunpack.c.l.b16 %v1228
    %v1427 = vunpack.c.l.b16 %v1229
    %v1428 = vunpack.c.l.b16 %v1230
    %v1429 = vunpack.c.l.b16 %v1231
    %v1430 = vunpack.c.l.b16 %v1232
    %v1431 = vunpack.c.l.b16 %v1233
    %v1432 = vunpack.c.l.b16 %v1234
    %v1433 = vpack.c.b16 %v1426, %v1425
    %v1434 = vpack.c.b16 %v1428, %v1427
    %v1435 = vpack.c.b16 %v1430, %v1429
    %v1436 = vpack.c.b16 %v1432, %v1431
    %v1438 = vsel %vm408, %v1433, 0
    %v1441 = vsel %vm408, %v1434, 0
    %v1444 = vsel %vm408, %v1435, 0
    %v1447 = vsel %vm408, %v1436, 0
    %1449 = vmatprep.subr.bf16.mxu0 0
    %1450 = vmatpush1.bf16.msra.mxu0 %v1376
    %1451 = vmatprep.subr.bf16.mxu0 0
    %1452 = vmatpush1.bf16.msra.mxu0 0
    %1453 = vmatprep.subr.bf16.mxu0 0
    %1454 = vmatpush1.bf16.msra.mxu0 0
    %1455 = vmatprep.subr.bf16.mxu0 0
    %1456 = vmatpush1.bf16.msra.mxu0 0
    %1457 = vmatprep.subr.bf16.mxu0 0
    %1458 = vmatpush1.bf16.msra.mxu0 0
    %1459 = vmatprep.subr.bf16.mxu0 0
    %1460 = vmatpush1.bf16.msra.mxu0 0
    %1461 = vmatprep.subr.bf16.mxu0 0
    %1462 = vmatpush1.bf16.msra.mxu0 0
    %1463 = vmatprep.subr.bf16.mxu0 0
    %1464 = vmatpush1.bf16.msra.mxu0 0
    %1465 = vmatprep.subr.bf16.mxu0 0
    %1466 = vmatpush1.bf16.msra.mxu0 0
    %1467 = vmatprep.subr.bf16.mxu0 0
    %1468 = vmatpush1.bf16.msra.mxu0 0
    %1469 = vmatprep.subr.bf16.mxu0 0
    %1470 = vmatpush1.bf16.msra.mxu0 0
    %1471 = vmatprep.subr.bf16.mxu0 0
    %1472 = vmatpush1.bf16.msra.mxu0 0
    %1473 = vmatprep.subr.bf16.mxu0 0
    %1474 = vmatpush1.bf16.msra.mxu0 0
    %1475 = vmatprep.subr.bf16.mxu0 0
    %1476 = vmatpush1.bf16.msra.mxu0 0
    %1477 = vmatprep.subr.bf16.mxu0 0
    %1478 = vmatpush1.bf16.msra.mxu0 0
    %1479 = vmatprep.subr.bf16.mxu0 0
    %1480 = vmatpush1.bf16.msra.mxu0 0
    %1481 = vmatprep.mubr.bf16.mxu0 0
    %1482 = vmatmul.mubr.bf16.gmra.mrb[0].mxu0 %v1438
    %v1483 = vpop.f32.mrb[0].mxu0
    %v1484 = vadd.f32 %v1380, %v1483
    %v1485 = vpop.f32.mrb[0].mxu0
    %v1486 = vpop.f32.mrb[0].mxu0
    %v1487 = vadd.f32 %v1385, %v1486
    %v1488 = vpop.f32.mrb[0].mxu0
    %1489 = vmatprep.mubr.bf16.mxu0 0
    %1490 = vmatmul.mubr.bf16.gmra.mrb[0].mxu0 %v1441
    %v1491 = vpop.f32.mrb[0].mxu0
    %v1492 = vadd.f32 %v1390, %v1491
    %v1493 = vpop.f32.mrb[0].mxu0
    %v1494 = vpop.f32.mrb[0].mxu0
    %v1495 = vadd.f32 %v1395, %v1494
    %v1496 = vpop.f32.mrb[0].mxu0
    %1497 = vmatprep.mubr.bf16.mxu0 0
    %1498 = vmatmul.mubr.bf16.gmra.mrb[0].mxu0 %v1444
    %v1499 = vpop.f32.mrb[0].mxu0
    %v1500 = vadd.f32 %v1400, %v1499
    %v1501 = vpop.f32.mrb[0].mxu0
    %v1502 = vpop.f32.mrb[0].mxu0
    %v1503 = vadd.f32 %v1405, %v1502
    %v1504 = vpop.f32.mrb[0].mxu0
    %1505 = vmatprep.mubr.bf16.mxu0 0
    %1506 = vmatmul.mubr.bf16.gmra.mrb[0].mxu0 %v1447
    %v1507 = vpop.f32.mrb[0].mxu0
    %v1508 = vadd.f32 %v1410, %v1507
    %v1509 = vpop.f32.mrb[0].mxu0
    %v1510 = vpop.f32.mrb[0].mxu0
    %v1511 = vadd.f32 %v1415, %v1510
    %v1512 = vpop.f32.mrb[0].mxu0
    %1513 = vdwg.mxu0
    %v1514 = vmul.f32 %v1484, 0.5
    %v1515 = vmul.f32 %v1487, 0.5
    %v1516 = vmul.f32 %v1492, 0.5
    %v1517 = vmul.f32 %v1495, 0.5
    %v1518 = vmul.f32 %v1500, 0.5
    %v1519 = vmul.f32 %v1503, 0.5
    %v1520 = vmul.f32 %v1508, 0.5
    %v1521 = vmul.f32 %v1511, 0.5
    %v1522 = vmul.f32 %v1484, 0.70710677
    %v1523 = vmul.f32 %v1487, 0.70710677
    %v1524 = vmul.f32 %v1492, 0.70710677
    %v1525 = vmul.f32 %v1495, 0.70710677
    %v1526 = vmul.f32 %v1500, 0.70710677
    %v1527 = vmul.f32 %v1503, 0.70710677
    %v1528 = vmul.f32 %v1508, 0.70710677
    %v1529 = vmul.f32 %v1511, 0.70710677
    %v1530 = verf.f32.pop %v1522
    %v1531 = verf.f32.pop %v1523
    %v1532 = verf.f32.pop %v1524
    %v1533 = verf.f32.pop %v1525
    %v1534 = verf.f32.pop %v1526
    %v1535 = verf.f32.pop %v1527
    %v1536 = verf.f32.pop %v1528
    %v1537 = verf.f32.pop %v1529
    %v1538 = vadd.f32 %v1530, 1.0
    %v1539 = vadd.f32 %v1531, 1.0
    %v1540 = vadd.f32 %v1532, 1.0
    %v1541 = vadd.f32 %v1533, 1.0
    %v1542 = vadd.f32 %v1534, 1.0
    %v1543 = vadd.f32 %v1535, 1.0
    %v1544 = vadd.f32 %v1536, 1.0
    %v1545 = vadd.f32 %v1537, 1.0
    %v1546 = vmul.f32 %v1514, %v1538
    %v1547 = vmul.f32 %v1515, %v1539
    %v1548 = vmul.f32 %v1516, %v1540
    %v1549 = vmul.f32 %v1517, %v1541
    %v1550 = vmul.f32 %v1518, %v1542
    %v1551 = vmul.f32 %v1519, %v1543
    %v1552 = vmul.f32 %v1520, %v1544
    %v1553 = vmul.f32 %v1521, %v1545
    %v1554 = vpack.c.bf16 %v1547, %v1546
    %v1555 = vpack.c.bf16 %v1549, %v1548
    %v1556 = vpack.c.bf16 %v1551, %v1550
    %v1557 = vpack.c.bf16 %v1553, %v1552
    %v1560 = vunpack.c.l.b16 %v1236
    %v1561 = vunpack.c.l.b16 %v1237
    %v1562 = vpack.c.b16 %v1561, %v1560
    %v1564 = vsel %vm535, %v1562, 0
    %1566 = vmatprep.subr.bf16.mxu0 0
    %1567 = vmatpush1.bf16.msra.mxu0 %v1554
    %1568 = vmatprep.subr.bf16.mxu0 0
    %1569 = vmatpush1.bf16.msra.mxu0 %v1555
    %1570 = vmatprep.subr.bf16.mxu0 0
    %1571 = vmatpush1.bf16.msra.mxu0 %v1556
    %1572 = vmatprep.subr.bf16.mxu0 0
    %1573 = vmatpush1.bf16.msra.mxu0 %v1557
    %1574 = vmatprep.subr.bf16.mxu0 0
    %1575 = vmatpush1.bf16.msra.mxu0 0
    %1576 = vmatprep.subr.bf16.mxu0 0
    %1577 = vmatpush1.bf16.msra.mxu0 0
    %1578 = vmatprep.subr.bf16.mxu0 0
    %1579 = vmatpush1.bf16.msra.mxu0 0
    %1580 = vmatprep.subr.bf16.mxu0 0
    %1581 = vmatpush1.bf16.msra.mxu0 0
    %1582 = vmatprep.subr.bf16.mxu0 0
    %1583 = vmatpush1.bf16.msra.mxu0 0
    %1584 = vmatprep.subr.bf16.mxu0 0
    %1585 = vmatpush1.bf16.msra.mxu0 0
    %1586 = vmatprep.subr.bf16.mxu0 0
    %1587 = vmatpush1.bf16.msra.mxu0 0
    %1588 = vmatprep.subr.bf16.mxu0 0
    %1589 = vmatpush1.bf16.msra.mxu0 0
    %1590 = vmatprep.subr.bf16.mxu0 0
    %1591 = vmatpush1.bf16.msra.mxu0 0
    %1592 = vmatprep.subr.bf16.mxu0 0
    %1593 = vmatpush1.bf16.msra.mxu0 0
    %1594 = vmatprep.subr.bf16.mxu0 0
    %1595 = vmatpush1.bf16.msra.mxu0 0
    %1596 = vmatprep.subr.bf16.mxu0 0
    %1597 = vmatpush1.bf16.msra.mxu0 0
    %1598 = vmatprep.mubr.bf16.mxu0 0
    %1599 = vmatmul.mubr.bf16.gmra.mrb[0].mxu0 %v1564
    %v1600 = vpop.f32.mrb[0].mxu0
    %v1601 = vadd.f32 0.0, %v1600
    %v1602 = vpop.f32.mrb[0].mxu0
    %v1603 = vpop.f32.mrb[0].mxu0
    %v1604 = vadd.f32 0.0, %v1603
    %v1605 = vpop.f32.mrb[0].mxu0
    %1606 = vdwg.mxu0
    %v1607 = vadd.f32 %v1224, %v1601
    %v1608 = vadd.f32 %v1225, %v1604
    %1610 = vset.pattern.permute.xlu0 0
    %1611 = vperm.xlu0 %1610, %v90
    %v1612 = vpop.permute.xlu0 %1611
    %1615 = vset.pattern.permute.xlu0 0
    %1616 = vperm.xlu0 %1615, %v91
    %v1617 = vpop.permute.xlu0 %1616
    %v1619 = vadd.f32 %v1607, %v1612
    %v1620 = vadd.f32 %v1608, %v1617
    %1621 = vadd.xlane.f32.xlu0 %v1619
    %v1622 = vpop.xlane.xlu0 %1621
    %1623 = vadd.xlane.f32.xlu0 %v1620
    %v1624 = vpop.xlane.xlu0 %1623
    %v1625 = vmul.f32 %v1619, %v1619
    %v1626 = vmul.f32 %v1620, %v1620
    %1627 = vadd.xlane.f32.xlu0 %v1625
    %v1628 = vpop.xlane.xlu0 %1627
    %1629 = vadd.xlane.f32.xlu0 %v1626
    %v1630 = vpop.xlane.xlu0 %1629
    %v1631 = vmul.f32 %v1622, 0.0078125
    %v1632 = vmul.f32 %v1624, 0.0078125
    %v1633 = vmul.f32 %v1628, 0.0078125
    %v1634 = vmul.f32 %v1630, 0.0078125
    %v1635 = vmul.f32 %v1631, %v1631
    %v1636 = vmul.f32 %v1632, %v1632
    %v1637 = vsub.f32 %v1633, %v1635
    %v1638 = vsub.f32 %v1634, %v1636
    %v1639 = vsub.f32 %v1619, %v1631
    %v1640 = vsub.f32 %v1620, %v1632
    %v1641 = vadd.f32 %v1637, 1e-05
    %v1642 = vadd.f32 %v1638, 1e-05
    %v1643 = vrsqrt.pop %v1641
    %v1644 = vrsqrt.pop %v1642
    %v1645 = vmul.f32 %v1639, %v1643
    %v1646 = vmul.f32 %v1640, %v1644
    %v1647 = vlaneseq
    %v1648 = vshrl.u32 %v1647, 7
    %v1649 = vsub.s32 2, %v1648
    %v1650 = vrot.slane %v71, %v1649
    %v1651 = vmul.f32 %v1645, %v1650
    %v1652 = vmul.f32 %v1646, %v1650
    %v1653 = vlaneseq
    %v1654 = vshrl.u32 %v1653, 7
    %v1655 = vsub.s32 3, %v1654
    %v1656 = vrot.slane %v71, %v1655
    %v1657 = vadd.f32 %v1651, %v1656
    %v1658 = vadd.f32 %v1652, %v1656
    %v1659 = vpack.c.bf16 %v1658, %v1657
    %v1661 = vlaneseq
    %v1662 = vshrl.u32 %v1661, 7
    %v1663 = vsub.s32 0, %v1662
    %v1664 = vrot.slane %v1337, %v1663
    %v1665 = vlaneseq
    %v1666 = vshrl.u32 %v1665, 7
    %v1667 = vsub.s32 1, %v1666
    %v1668 = vrot.slane %v1337, %v1667
    %v1669 = vlaneseq
    %v1670 = vshrl.u32 %v1669, 7
    %v1671 = vsub.s32 2, %v1670
    %v1672 = vrot.slane %v1337, %v1671
    %v1673 = vlaneseq
    %v1674 = vshrl.u32 %v1673, 7
    %v1675 = vsub.s32 3, %v1674
    %v1676 = vrot.slane %v1337, %v1675
    %v1713 = vunpack.c.l.b16 %v1239
    %v1714 = vunpack.c.h.b16 %v1239
    %v1715 = vunpack.c.l.b16 %v1240
    %v1716 = vunpack.c.h.b16 %v1240
    %v1717 = vunpack.c.l.b16 %v1241
    %v1718 = vunpack.c.h.b16 %v1241
    %v1719 = vunpack.c.l.b16 %v1242
    %v1720 = vunpack.c.h.b16 %v1242
    %v1721 = vunpack.c.l.b16 %v1243
    %v1722 = vunpack.c.h.b16 %v1243
    %v1723 = vunpack.c.l.b16 %v1244
    %v1724 = vunpack.c.h.b16 %v1244
    %v1725 = vunpack.c.l.b16 %v1245
    %v1726 = vunpack.c.h.b16 %v1245
    %v1727 = vunpack.c.l.b16 %v1246
    %v1728 = vunpack.c.h.b16 %v1246
    %v1729 = vunpack.c.l.b16 %v1247
    %v1730 = vunpack.c.h.b16 %v1247
    %v1731 = vunpack.c.l.b16 %v1248
    %v1732 = vunpack.c.h.b16 %v1248
    %v1733 = vunpack.c.l.b16 %v1249
    %v1734 = vunpack.c.h.b16 %v1249
    %v1735 = vunpack.c.l.b16 %v1250
    %v1736 = vunpack.c.h.b16 %v1250
    %v1737 = vunpack.c.l.b16 %v1251
    %v1738 = vunpack.c.h.b16 %v1251
    %v1739 = vunpack.c.l.b16 %v1252
    %v1740 = vunpack.c.h.b16 %v1252
    %v1741 = vunpack.c.l.b16 %v1253
    %v1742 = vunpack.c.h.b16 %v1253
    %v1743 = vunpack.c.l.b16 %v1254
    %v1744 = vunpack.c.h.b16 %v1254
    %v1745 = vunpack.c.l.b16 %v1255
    %v1746 = vunpack.c.h.b16 %v1255
    %v1747 = vunpack.c.l.b16 %v1256
    %v1748 = vunpack.c.h.b16 %v1256
    %v1749 = vunpack.c.l.b16 %v1257
    %v1750 = vunpack.c.h.b16 %v1257
    %v1751 = vunpack.c.l.b16 %v1258
    %v1752 = vunpack.c.h.b16 %v1258
    %v1753 = vunpack.c.l.b16 %v1259
    %v1754 = vunpack.c.h.b16 %v1259
    %v1755 = vunpack.c.l.b16 %v1260
    %v1756 = vunpack.c.h.b16 %v1260
    %v1757 = vunpack.c.l.b16 %v1261
    %v1758 = vunpack.c.h.b16 %v1261
    %v1759 = vunpack.c.l.b16 %v1262
    %v1760 = vunpack.c.h.b16 %v1262
    %v1761 = vunpack.c.l.b16 %v1263
    %v1762 = vunpack.c.h.b16 %v1263
    %v1763 = vunpack.c.l.b16 %v1264
    %v1764 = vunpack.c.h.b16 %v1264
    %v1765 = vunpack.c.l.b16 %v1265
    %v1766 = vunpack.c.h.b16 %v1265
    %v1767 = vunpack.c.l.b16 %v1266
    %v1768 = vunpack.c.h.b16 %v1266
    %v1769 = vunpack.c.l.b16 %v1267
    %v1770 = vunpack.c.h.b16 %v1267
    %v1771 = vunpack.c.l.b16 %v1268
    %v1772 = vunpack.c.h.b16 %v1268
    %v1773 = vunpack.c.l.b16 %v1269
    %v1774 = vunpack.c.h.b16 %v1269
    %v1775 = vunpack.c.l.b16 %v1270
    %v1776 = vunpack.c.h.b16 %v1270
    %v1777 = vpack.c.b16 %v1717, %v1713
    %v1778 = vpack.c.b16 %v1718, %v1714
    %v1779 = vpack.c.b16 %v1719, %v1715
    %v1780 = vpack.c.b16 %v1720, %v1716
    %v1781 = vpack.c.b16 %v1725, %v1721
    %v1782 = vpack.c.b16 %v1726, %v1722
    %v1783 = vpack.c.b16 %v1727, %v1723
    %v1784 = vpack.c.b16 %v1728, %v1724
    %v1785 = vpack.c.b16 %v1733, %v1729
    %v1786 = vpack.c.b16 %v1734, %v1730
    %v1787 = vpack.c.b16 %v1735, %v1731
    %v1788 = vpack.c.b16 %v1736, %v1732
    %v1789 = vpack.c.b16 %v1741, %v1737
    %v1790 = vpack.c.b16 %v1742, %v1738
    %v1791 = vpack.c.b16 %v1743, %v1739
    %v1792 = vpack.c.b16 %v1744, %v1740
    %v1793 = vpack.c.b16 %v1749, %v1745
    %v1794 = vpack.c.b16 %v1750, %v1746
    %v1795 = vpack.c.b16 %v1751, %v1747
    %v1796 = vpack.c.b16 %v1752, %v1748
    %v1797 = vpack.c.b16 %v1757, %v1753
    %v1798 = vpack.c.b16 %v1758, %v1754
    %v1799 = vpack.c.b16 %v1759, %v1755
    %v1800 = vpack.c.b16 %v1760, %v1756
    %v1801 = vpack.c.b16 %v1765, %v1761
    %v1802 = vpack.c.b16 %v1766, %v1762
    %v1803 = vpack.c.b16 %v1767, %v1763
    %v1804 = vpack.c.b16 %v1768, %v1764
    %v1805 = vpack.c.b16 %v1773, %v1769
    %v1806 = vpack.c.b16 %v1774, %v1770
    %v1807 = vpack.c.b16 %v1775, %v1771
    %v1808 = vpack.c.b16 %v1776, %v1772
    %1841 = vmatprep.subr.bf16.mxu0 %v1778
    %1842 = vmatpush1.bf16.msra.mxu0 %v1777
    %1843 = vmatprep.subr.bf16.mxu0 %v1782
    %1844 = vmatpush1.bf16.msra.mxu0 %v1781
    %1845 = vmatprep.subr.bf16.mxu0 %v1786
    %1846 = vmatpush1.bf16.msra.mxu0 %v1785
    %1847 = vmatprep.subr.bf16.mxu0 %v1790
    %1848 = vmatpush1.bf16.msra.mxu0 %v1789
    %1849 = vmatprep.subr.bf16.mxu0 %v1794
    %1850 = vmatpush1.bf16.msra.mxu0 %v1793
    %1851 = vmatprep.subr.bf16.mxu0 %v1798
    %1852 = vmatpush1.bf16.msra.mxu0 %v1797
    %1853 = vmatprep.subr.bf16.mxu0 %v1802
    %1854 = vmatpush1.bf16.msra.mxu0 %v1801
    %1855 = vmatprep.subr.bf16.mxu0 %v1806
    %1856 = vmatpush1.bf16.msra.mxu0 %v1805
    %1857 = vmatprep.subr.bf16.mxu0 0
    %1858 = vmatpush1.bf16.msra.mxu0 0
    %1859 = vmatprep.subr.bf16.mxu0 0
    %1860 = vmatpush1.bf16.msra.mxu0 0
    %1861 = vmatprep.subr.bf16.mxu0 0
    %1862 = vmatpush1.bf16.msra.mxu0 0
    %1863 = vmatprep.subr.bf16.mxu0 0
    %1864 = vmatpush1.bf16.msra.mxu0 0
    %1865 = vmatprep.subr.bf16.mxu0 0
    %1866 = vmatpush1.bf16.msra.mxu0 0
    %1867 = vmatprep.subr.bf16.mxu0 0
    %1868 = vmatpush1.bf16.msra.mxu0 0
    %1869 = vmatprep.subr.bf16.mxu0 0
    %1870 = vmatpush1.bf16.msra.mxu0 0
    %1871 = vmatprep.subr.bf16.mxu0 0
    %1872 = vmatpush1.bf16.msra.mxu0 0
    %1873 = vmatprep.mubr.bf16.mxu0 0
    %1874 = vmatmul.mubr.bf16.gmra.mrb[0].mxu0 %v1659
    %v1875 = vpop.f32.mrb[0].mxu0
    %v1876 = vadd.f32 %v1664, %v1875
    %v1877 = vpop.f32.mrb[0].mxu0
    %v1878 = vadd.f32 %v1668, %v1877
    %v1879 = vpop.f32.mrb[0].mxu0
    %v1880 = vadd.f32 %v1664, %v1879
    %v1881 = vpop.f32.mrb[0].mxu0
    %v1882 = vadd.f32 %v1668, %v1881
    %1883 = vdwg.mxu0
    %1884 = vmatprep.subr.bf16.mxu0 %v1780
    %1885 = vmatpush1.bf16.msra.mxu0 %v1779
    %1886 = vmatprep.subr.bf16.mxu0 %v1784
    %1887 = vmatpush1.bf16.msra.mxu0 %v1783
    %1888 = vmatprep.subr.bf16.mxu0 %v1788
    %1889 = vmatpush1.bf16.msra.mxu0 %v1787
    %1890 = vmatprep.subr.bf16.mxu0 %v1792
    %1891 = vmatpush1.bf16.msra.mxu0 %v1791
    %1892 = vmatprep.subr.bf16.mxu0 %v1796
    %1893 = vmatpush1.bf16.msra.mxu0 %v1795
    %1894 = vmatprep.subr.bf16.mxu0 %v1800
    %1895 = vmatpush1.bf16.msra.mxu0 %v1799
    %1896 = vmatprep.subr.bf16.mxu0 %v1804
    %1897 = vmatpush1.bf16.msra.mxu0 %v1803
    %1898 = vmatprep.subr.bf16.mxu0 %v1808
    %1899 = vmatpush1.bf16.msra.mxu0 %v1807
    %1900 = vmatprep.subr.bf16.mxu0 0
    %1901 = vmatpush1.bf16.msra.mxu0 0
    %1902 = vmatprep.subr.bf16.mxu0 0
    %1903 = vmatpush1.bf16.msra.mxu0 0
    %1904 = vmatprep.subr.bf16.mxu0 0
    %1905 = vmatpush1.bf16.msra.mxu0 0
    %1906 = vmatprep.subr.bf16.mxu0 0
    %1907 = vmatpush1.bf16.msra.mxu0 0
    %1908 = vmatprep.subr.bf16.mxu0 0
    %1909 = vmatpush1.bf16.msra.mxu0 0
    %1910 = vmatprep.subr.bf16.mxu0 0
    %1911 = vmatpush1.bf16.msra.mxu0 0
    %1912 = vmatprep.subr.bf16.mxu0 0
    %1913 = vmatpush1.bf16.msra.mxu0 0
    %1914 = vmatprep.subr.bf16.mxu0 0
    %1915 = vmatpush1.bf16.msra.mxu0 0
    %1916 = vmatprep.mubr.bf16.mxu0 0
    %1917 = vmatmul.mubr.bf16.gmra.mrb[0].mxu0 %v1659
    %v1918 = vpop.f32.mrb[0].mxu0
    %v1919 = vadd.f32 %v1672, %v1918
    %v1920 = vpop.f32.mrb[0].mxu0
    %v1921 = vadd.f32 %v1676, %v1920
    %v1922 = vpop.f32.mrb[0].mxu0
    %v1923 = vadd.f32 %v1672, %v1922
    %v1924 = vpop.f32.mrb[0].mxu0
    %v1925 = vadd.f32 %v1676, %v1924
    %1926 = vdwg.mxu0
    %v1927 = vmul.f32 %v1876, 0.5
    %v1928 = vmul.f32 %v1878, 0.5
    %v1929 = vmul.f32 %v1919, 0.5
    %v1930 = vmul.f32 %v1921, 0.5
    %v1931 = vmul.f32 %v1880, 0.5
    %v1932 = vmul.f32 %v1882, 0.5
    %v1933 = vmul.f32 %v1923, 0.5
    %v1934 = vmul.f32 %v1925, 0.5
    %v1935 = vmul.f32 %v1876, 0.70710677
    %v1936 = vmul.f32 %v1878, 0.70710677
    %v1937 = vmul.f32 %v1919, 0.70710677
    %v1938 = vmul.f32 %v1921, 0.70710677
    %v1939 = vmul.f32 %v1880, 0.70710677
    %v1940 = vmul.f32 %v1882, 0.70710677
    %v1941 = vmul.f32 %v1923, 0.70710677
    %v1942 = vmul.f32 %v1925, 0.70710677
    %v1943 = verf.f32.pop %v1935
    %v1944 = verf.f32.pop %v1936
    %v1945 = verf.f32.pop %v1937
    %v1946 = verf.f32.pop %v1938
    %v1947 = verf.f32.pop %v1939
    %v1948 = verf.f32.pop %v1940
    %v1949 = verf.f32.pop %v1941
    %v1950 = verf.f32.pop %v1942
    %v1951 = vadd.f32 %v1943, 1.0
    %v1952 = vadd.f32 %v1944, 1.0
    %v1953 = vadd.f32 %v1945, 1.0
    %v1954 = vadd.f32 %v1946, 1.0
    %v1955 = vadd.f32 %v1947, 1.0
    %v1956 = vadd.f32 %v1948, 1.0
    %v1957 = vadd.f32 %v1949, 1.0
    %v1958 = vadd.f32 %v1950, 1.0
    %v1959 = vmul.f32 %v1927, %v1951
    %v1960 = vmul.f32 %v1928, %v1952
    %v1961 = vmul.f32 %v1929, %v1953
    %v1962 = vmul.f32 %v1930, %v1954
    %v1963 = vmul.f32 %v1931, %v1955
    %v1964 = vmul.f32 %v1932, %v1956
    %v1965 = vmul.f32 %v1933, %v1957
    %v1966 = vmul.f32 %v1934, %v1958
    %v1967 = vpack.c.bf16 %v1963, %v1959
    %v1968 = vpack.c.bf16 %v1964, %v1960
    %v1969 = vpack.c.bf16 %v1965, %v1961
    %v1970 = vpack.c.bf16 %v1966, %v1962
    %v2035 = vunpack.c.l.b16 %v1272
    %v2036 = vunpack.c.l.b16 %v1273
    %v2037 = vunpack.c.l.b16 %v1274
    %v2038 = vunpack.c.l.b16 %v1275
    %v2039 = vunpack.c.l.b16 %v1276
    %v2040 = vunpack.c.l.b16 %v1277
    %v2041 = vunpack.c.l.b16 %v1278
    %v2042 = vunpack.c.l.b16 %v1279
    %v2043 = vunpack.c.l.b16 %v1280
    %v2044 = vunpack.c.l.b16 %v1281
    %v2045 = vunpack.c.l.b16 %v1282
    %v2046 = vunpack.c.l.b16 %v1283
    %v2047 = vunpack.c.l.b16 %v1284
    %v2048 = vunpack.c.l.b16 %v1285
    %v2049 = vunpack.c.l.b16 %v1286
    %v2050 = vunpack.c.l.b16 %v1287
    %v2051 = vunpack.c.l.b16 %v1288
    %v2052 = vunpack.c.l.b16 %v1289
    %v2053 = vunpack.c.l.b16 %v1290
    %v2054 = vunpack.c.l.b16 %v1291
    %v2055 = vunpack.c.l.b16 %v1292
    %v2056 = vunpack.c.l.b16 %v1293
    %v2057 = vunpack.c.l.b16 %v1294
    %v2058 = vunpack.c.l.b16 %v1295
    %v2059 = vunpack.c.l.b16 %v1296
    %v2060 = vunpack.c.l.b16 %v1297
    %v2061 = vunpack.c.l.b16 %v1298
    %v2062 = vunpack.c.l.b16 %v1299
    %v2063 = vunpack.c.l.b16 %v1300
    %v2064 = vunpack.c.l.b16 %v1301
    %v2065 = vunpack.c.l.b16 %v1302
    %v2066 = vunpack.c.l.b16 %v1303
    %v2067 = vunpack.c.l.b16 %v1304
    %v2068 = vunpack.c.l.b16 %v1305
    %v2069 = vunpack.c.l.b16 %v1306
    %v2070 = vunpack.c.l.b16 %v1307
    %v2071 = vunpack.c.l.b16 %v1308
    %v2072 = vunpack.c.l.b16 %v1309
    %v2073 = vunpack.c.l.b16 %v1310
    %v2074 = vunpack.c.l.b16 %v1311
    %v2075 = vunpack.c.l.b16 %v1312
    %v2076 = vunpack.c.l.b16 %v1313
    %v2077 = vunpack.c.l.b16 %v1314
    %v2078 = vunpack.c.l.b16 %v1315
    %v2079 = vunpack.c.l.b16 %v1316
    %v2080 = vunpack.c.l.b16 %v1317
    %v2081 = vunpack.c.l.b16 %v1318
    %v2082 = vunpack.c.l.b16 %v1319
    %v2083 = vunpack.c.l.b16 %v1320
    %v2084 = vunpack.c.l.b16 %v1321
    %v2085 = vunpack.c.l.b16 %v1322
    %v2086 = vunpack.c.l.b16 %v1323
    %v2087 = vunpack.c.l.b16 %v1324
    %v2088 = vunpack.c.l.b16 %v1325
    %v2089 = vunpack.c.l.b16 %v1326
    %v2090 = vunpack.c.l.b16 %v1327
    %v2091 = vunpack.c.l.b16 %v1328
    %v2092 = vunpack.c.l.b16 %v1329
    %v2093 = vunpack.c.l.b16 %v1330
    %v2094 = vunpack.c.l.b16 %v1331
    %v2095 = vunpack.c.l.b16 %v1332
    %v2096 = vunpack.c.l.b16 %v1333
    %v2097 = vunpack.c.l.b16 %v1334
    %v2098 = vunpack.c.l.b16 %v1335
    %v2099 = vpack.c.b16 %v2036, %v2035
    %v2100 = vpack.c.b16 %v2038, %v2037
    %v2101 = vpack.c.b16 %v2040, %v2039
    %v2102 = vpack.c.b16 %v2042, %v2041
    %v2103 = vpack.c.b16 %v2044, %v2043
    %v2104 = vpack.c.b16 %v2046, %v2045
    %v2105 = vpack.c.b16 %v2048, %v2047
    %v2106 = vpack.c.b16 %v2050, %v2049
    %v2107 = vpack.c.b16 %v2052, %v2051
    %v2108 = vpack.c.b16 %v2054, %v2053
    %v2109 = vpack.c.b16 %v2056, %v2055
    %v2110 = vpack.c.b16 %v2058, %v2057
    %v2111 = vpack.c.b16 %v2060, %v2059
    %v2112 = vpack.c.b16 %v2062, %v2061
    %v2113 = vpack.c.b16 %v2064, %v2063
    %v2114 = vpack.c.b16 %v2066, %v2065
    %v2115 = vpack.c.b16 %v2068, %v2067
    %v2116 = vpack.c.b16 %v2070, %v2069
    %v2117 = vpack.c.b16 %v2072, %v2071
    %v2118 = vpack.c.b16 %v2074, %v2073
    %v2119 = vpack.c.b16 %v2076, %v2075
    %v2120 = vpack.c.b16 %v2078, %v2077
    %v2121 = vpack.c.b16 %v2080, %v2079
    %v2122 = vpack.c.b16 %v2082, %v2081
    %v2123 = vpack.c.b16 %v2084, %v2083
    %v2124 = vpack.c.b16 %v2086, %v2085
    %v2125 = vpack.c.b16 %v2088, %v2087
    %v2126 = vpack.c.b16 %v2090, %v2089
    %v2127 = vpack.c.b16 %v2092, %v2091
    %v2128 = vpack.c.b16 %v2094, %v2093
    %v2129 = vpack.c.b16 %v2096, %v2095
    %v2130 = vpack.c.b16 %v2098, %v2097
    %2163 = vmatprep.subr.bf16.mxu0 0
    %2164 = vmatpush1.bf16.msra.mxu0 %v2099
    %2165 = vmatprep.subr.bf16.mxu0 0
    %2166 = vmatpush1.bf16.msra.mxu0 %v2100
    %2167 = vmatprep.subr.bf16.mxu0 0
    %2168 = vmatpush1.bf16.msra.mxu0 %v2101
    %2169 = vmatprep.subr.bf16.mxu0 0
    %2170 = vmatpush1.bf16.msra.mxu0 %v2102
    %2171 = vmatprep.subr.bf16.mxu0 0
    %2172 = vmatpush1.bf16.msra.mxu0 %v2103
    %2173 = vmatprep.subr.bf16.mxu0 0
    %2174 = vmatpush1.bf16.msra.mxu0 %v2104
    %2175 = vmatprep.subr.bf16.mxu0 0
    %2176 = vmatpush1.bf16.msra.mxu0 %v2105
    %2177 = vmatprep.subr.bf16.mxu0 0
    %2178 = vmatpush1.bf16.msra.mxu0 %v2106
    %2179 = vmatprep.subr.bf16.mxu0 0
    %2180 = vmatpush1.bf16.msra.mxu0 %v2107
    %2181 = vmatprep.subr.bf16.mxu0 0
    %2182 = vmatpush1.bf16.msra.mxu0 %v2108
    %2183 = vmatprep.subr.bf16.mxu0 0
    %2184 = vmatpush1.bf16.msra.mxu0 %v2109
    %2185 = vmatprep.subr.bf16.mxu0 0
    %2186 = vmatpush1.bf16.msra.mxu0 %v2110
    %2187 = vmatprep.subr.bf16.mxu0 0
    %2188 = vmatpush1.bf16.msra.mxu0 %v2111
    %2189 = vmatprep.subr.bf16.mxu0 0
    %2190 = vmatpush1.bf16.msra.mxu0 %v2112
    %2191 = vmatprep.subr.bf16.mxu0 0
    %2192 = vmatpush1.bf16.msra.mxu0 %v2113
    %2193 = vmatprep.subr.bf16.mxu0 0
    %2194 = vmatpush1.bf16.msra.mxu0 %v2114
    %2195 = vmatprep.mubr.bf16.mxu0 %v1968
    %2196 = vmatmul.mubr.bf16.gmra.mrb[0].mxu0 %v1967
    %v2197 = vpop.f32.mrb[0].mxu0
    %v2198 = vadd.f32 0.0, %v2197
    %v2199 = vpop.f32.mrb[0].mxu0
    %v2200 = vpop.f32.mrb[0].mxu0
    %v2201 = vadd.f32 0.0, %v2200
    %v2202 = vpop.f32.mrb[0].mxu0
    %2203 = vdwg.mxu0
    %2204 = vmatprep.subr.bf16.mxu0 0
    %2205 = vmatpush1.bf16.msra.mxu0 %v2115
    %2206 = vmatprep.subr.bf16.mxu0 0
    %2207 = vmatpush1.bf16.msra.mxu0 %v2116
    %2208 = vmatprep.subr.bf16.mxu0 0
    %2209 = vmatpush1.bf16.msra.mxu0 %v2117
    %2210 = vmatprep.subr.bf16.mxu0 0
    %2211 = vmatpush1.bf16.msra.mxu0 %v2118
    %2212 = vmatprep.subr.bf16.mxu0 0
    %2213 = vmatpush1.bf16.msra.mxu0 %v2119
    %2214 = vmatprep.subr.bf16.mxu0 0
    %2215 = vmatpush1.bf16.msra.mxu0 %v2120
    %2216 = vmatprep.subr.bf16.mxu0 0
    %2217 = vmatpush1.bf16.msra.mxu0 %v2121
    %2218 = vmatprep.subr.bf16.mxu0 0
    %2219 = vmatpush1.bf16.msra.mxu0 %v2122
    %2220 = vmatprep.subr.bf16.mxu0 0
    %2221 = vmatpush1.bf16.msra.mxu0 %v2123
    %2222 = vmatprep.subr.bf16.mxu0 0
    %2223 = vmatpush1.bf16.msra.mxu0 %v2124
    %2224 = vmatprep.subr.bf16.mxu0 0
    %2225 = vmatpush1.bf16.msra.mxu0 %v2125
    %2226 = vmatprep.subr.bf16.mxu0 0
    %2227 = vmatpush1.bf16.msra.mxu0 %v2126
    %2228 = vmatprep.subr.bf16.mxu0 0
    %2229 = vmatpush1.bf16.msra.mxu0 %v2127
    %2230 = vmatprep.subr.bf16.mxu0 0
    %2231 = vmatpush1.bf16.msra.mxu0 %v2128
    %2232 = vmatprep.subr.bf16.mxu0 0
    %2233 = vmatpush1.bf16.msra.mxu0 %v2129
    %2234 = vmatprep.subr.bf16.mxu0 0
    %2235 = vmatpush1.bf16.msra.mxu0 %v2130
    %2236 = vmatprep.mubr.bf16.mxu0 %v1970
    %2237 = vmatmul.mubr.bf16.gmra.mrb[0].mxu0 %v1969
    %v2238 = vpop.f32.mrb[0].mxu0
    %v2239 = vadd.f32 %v2198, %v2238
    %v2240 = vpop.f32.mrb[0].mxu0
    %v2241 = vpop.f32.mrb[0].mxu0
    %v2242 = vadd.f32 %v2201, %v2241
    %v2243 = vpop.f32.mrb[0].mxu0
    %2244 = vdwg.mxu0
    %v2245 = vadd.f32 %v1619, %v2239
    %v2246 = vadd.f32 %v1620, %v2242
    %v2247 = vlaneseq
    %v2248 = vshrl.u32 %v2247, 7
    %v2249 = vsub.s32 4, %v2248
    %v2250 = vrot.slane %v71, %v2249
    %v2251 = vadd.f32 %v2245, %v2250
    %v2252 = vadd.f32 %v2246, %v2250
    %2253 = vadd.xlane.f32.xlu0 %v2251
    %v2254 = vpop.xlane.xlu0 %2253
    %2255 = vadd.xlane.f32.xlu0 %v2252
    %v2256 = vpop.xlane.xlu0 %2255
    %v2257 = vmul.f32 %v2251, %v2251
    %v2258 = vmul.f32 %v2252, %v2252
    %2259 = vadd.xlane.f32.xlu0 %v2257
    %v2260 = vpop.xlane.xlu0 %2259
    %2261 = vadd.xlane.f32.xlu0 %v2258
    %v2262 = vpop.xlane.xlu0 %2261
    %v2263 = vmul.f32 %v2254, 0.0078125
    %v2264 = vmul.f32 %v2256, 0.0078125
    %v2265 = vmul.f32 %v2260, 0.0078125
    %v2266 = vmul.f32 %v2262, 0.0078125
    %v2267 = vmul.f32 %v2263, %v2263
    %v2268 = vmul.f32 %v2264, %v2264
    %v2269 = vsub.f32 %v2265, %v2267
    %v2270 = vsub.f32 %v2266, %v2268
    %v2271 = vsub.f32 %v2251, %v2263
    %v2272 = vsub.f32 %v2252, %v2264
    %v2273 = vadd.f32 %v2269, 1e-05
    %v2274 = vadd.f32 %v2270, 1e-05
    %v2275 = vrsqrt.pop %v2273
    %v2276 = vrsqrt.pop %v2274
    %v2277 = vmul.f32 %v2271, %v2275
    %v2278 = vmul.f32 %v2272, %v2276
    %v2279 = vlaneseq
    %v2280 = vshrl.u32 %v2279, 7
    %v2281 = vsub.s32 1, %v2280
    %v2282 = vrot.slane %v70, %v2281
    %v2283 = vmul.f32 %v2277, %v2282
    %v2284 = vmul.f32 %v2278, %v2282
    %v2285 = vlaneseq
    %v2286 = vshrl.u32 %v2285, 7
    %v2287 = vsub.s32 2, %v2286
    %v2288 = vrot.slane %v70, %v2287
    %v2289 = vadd.f32 %v2283, %v2288
    %v2290 = vadd.f32 %v2284, %v2288
    %v2291 = vld [vmem:[%s8] sm:$0xff]
    %v2292 = vld [vmem:[%s8 + $0x8] sm:$0xff]
    %v2293 = vld [vmem:[%s8 + $0x10] sm:$0xff]
    %v2294 = vld [vmem:[%s8 + $0x18] sm:$0xff]
    %v2295 = vld [vmem:[%s8 + $0x20] sm:$0xff]
    %v2296 = vld [vmem:[%s8 + $0x28] sm:$0xff]
    %v2297 = vld [vmem:[%s8 + $0x30] sm:$0xff]
    %v2298 = vld [vmem:[%s8 + $0x38] sm:$0xff]
    %v2299 = vld [vmem:[%s8 + $0x40] sm:$0xff]
    %v2300 = vld [vmem:[%s8 + $0x48] sm:$0xff]
    %v2301 = vld [vmem:[%s8 + $0x50] sm:$0xff]
    %v2302 = vld [vmem:[%s8 + $0x58] sm:$0xff]
    %v2303 = vld [vmem:[%s8 + $0x60] sm:$0xff]
    %v2304 = vld [vmem:[%s8 + $0x68] sm:$0xff]
    %v2305 = vld [vmem:[%s8 + $0x70] sm:$0xff]
    %v2306 = vld [vmem:[%s8 + $0x78] sm:$0xff]
    %v2307 = vpack.c.bf16 %v2290, %v2289
    %v2308 = vld [vmem:[%s9] sm:$0x3]
    %v2310 = vlaneseq
    %v2311 = vshrl.u32 %v2310, 7
    %v2312 = vsub.s32 0, %v2311
    %v2313 = vrot.slane %v2308, %v2312
    %v2314 = vlaneseq
    %v2315 = vshrl.u32 %v2314, 7
    %v2316 = vsub.s32 1, %v2315
    %v2317 = vrot.slane %v2308, %v2316
    %v2336 = vunpack.c.l.b16 %v2291
    %v2337 = vunpack.c.h.b16 %v2291
    %v2338 = vunpack.c.l.b16 %v2292
    %v2339 = vunpack.c.h.b16 %v2292
    %v2340 = vunpack.c.l.b16 %v2293
    %v2341 = vunpack.c.h.b16 %v2293
    %v2342 = vunpack.c.l.b16 %v2294
    %v2343 = vunpack.c.h.b16 %v2294
    %v2344 = vunpack.c.l.b16 %v2295
    %v2345 = vunpack.c.h.b16 %v2295
    %v2346 = vunpack.c.l.b16 %v2296
    %v2347 = vunpack.c.h.b16 %v2296
    %v2348 = vunpack.c.l.b16 %v2297
    %v2349 = vunpack.c.h.b16 %v2297
    %v2350 = vunpack.c.l.b16 %v2298
    %v2351 = vunpack.c.h.b16 %v2298
    %v2352 = vunpack.c.l.b16 %v2299
    %v2353 = vunpack.c.h.b16 %v2299
    %v2354 = vunpack.c.l.b16 %v2300
    %v2355 = vunpack.c.h.b16 %v2300
    %v2356 = vunpack.c.l.b16 %v2301
    %v2357 = vunpack.c.h.b16 %v2301
    %v2358 = vunpack.c.l.b16 %v2302
    %v2359 = vunpack.c.h.b16 %v2302
    %v2360 = vunpack.c.l.b16 %v2303
    %v2361 = vunpack.c.h.b16 %v2303
    %v2362 = vunpack.c.l.b16 %v2304
    %v2363 = vunpack.c.h.b16 %v2304
    %v2364 = vunpack.c.l.b16 %v2305
    %v2365 = vunpack.c.h.b16 %v2305
    %v2366 = vunpack.c.l.b16 %v2306
    %v2367 = vunpack.c.h.b16 %v2306
    %v2368 = vpack.c.b16 %v2338, %v2336
    %v2369 = vpack.c.b16 %v2339, %v2337
    %v2370 = vpack.c.b16 %v2342, %v2340
    %v2371 = vpack.c.b16 %v2343, %v2341
    %v2372 = vpack.c.b16 %v2346, %v2344
    %v2373 = vpack.c.b16 %v2347, %v2345
    %v2374 = vpack.c.b16 %v2350, %v2348
    %v2375 = vpack.c.b16 %v2351, %v2349
    %v2376 = vpack.c.b16 %v2354, %v2352
    %v2377 = vpack.c.b16 %v2355, %v2353
    %v2378 = vpack.c.b16 %v2358, %v2356
    %v2379 = vpack.c.b16 %v2359, %v2357
    %v2380 = vpack.c.b16 %v2362, %v2360
    %v2381 = vpack.c.b16 %v2363, %v2361
    %v2382 = vpack.c.b16 %v2366, %v2364
    %v2383 = vpack.c.b16 %v2367, %v2365
    %2400 = vmatprep.subr.bf16.mxu0 %v2369
    %2401 = vmatpush1.bf16.msra.mxu0 %v2368
    %2402 = vmatprep.subr.bf16.mxu0 %v2371
    %2403 = vmatpush1.bf16.msra.mxu0 %v2370
    %2404 = vmatprep.subr.bf16.mxu0 %v2373
    %2405 = vmatpush1.bf16.msra.mxu0 %v2372
    %2406 = vmatprep.subr.bf16.mxu0 %v2375
    %2407 = vmatpush1.bf16.msra.mxu0 %v2374
    %2408 = vmatprep.subr.bf16.mxu0 %v2377
    %2409 = vmatpush1.bf16.msra.mxu0 %v2376
    %2410 = vmatprep.subr.bf16.mxu0 %v2379
    %2411 = vmatpush1.bf16.msra.mxu0 %v2378
    %2412 = vmatprep.subr.bf16.mxu0 %v2381
    %2413 = vmatpush1.bf16.msra.mxu0 %v2380
    %2414 = vmatprep.subr.bf16.mxu0 %v2383
    %2415 = vmatpush1.bf16.msra.mxu0 %v2382
    %2416 = vmatprep.subr.bf16.mxu0 0
    %2417 = vmatpush1.bf16.msra.mxu0 0
    %2418 = vmatprep.subr.bf16.mxu0 0
    %2419 = vmatpush1.bf16.msra.mxu0 0
    %2420 = vmatprep.subr.bf16.mxu0 0
    %2421 = vmatpush1.bf16.msra.mxu0 0
    %2422 = vmatprep.subr.bf16.mxu0 0
    %2423 = vmatpush1.bf16.msra.mxu0 0
    %2424 = vmatprep.subr.bf16.mxu0 0
    %2425 = vmatpush1.bf16.msra.mxu0 0
    %2426 = vmatprep.subr.bf16.mxu0 0
    %2427 = vmatpush1.bf16.msra.mxu0 0
    %2428 = vmatprep.subr.bf16.mxu0 0
    %2429 = vmatpush1.bf16.msra.mxu0 0
    %2430 = vmatprep.subr.bf16.mxu0 0
    %2431 = vmatpush1.bf16.msra.mxu0 0
    %2432 = vmatprep.mubr.bf16.mxu0 0
    %2433 = vmatmul.mubr.bf16.gmra.mrb[0].mxu0 %v2307
    %v2434 = vpop.f32.mrb[0].mxu0
    %v2435 = vadd.f32 %v2313, %v2434
    %v2436 = vpop.f32.mrb[0].mxu0
    %v2437 = vadd.f32 %v2317, %v2436
    %v2438 = vpop.f32.mrb[0].mxu0
    %v2439 = vadd.f32 %v2313, %v2438
    %v2440 = vpop.f32.mrb[0].mxu0
    %v2441 = vadd.f32 %v2317, %v2440
    %2442 = vdwg.mxu0
    %2443 = vst [vmem:[#allocation7] sm:$0xff] %v2435
    %2444 = vst [vmem:[#allocation7 + $0x8] sm:$0xff] %v2437
    %2445 = vst [vmem:[#allocation7 + $0x10] sm:$0xff] %v2439
    %2446 = vst [vmem:[#allocation7 + $0x18] sm:$0xff] %v2441
    // Predicated region
    $region54: #{tpu_custom_call.1} parent=1 // pred_check
      _
    $region55: #{tpu_custom_call.1} parent=1 // pred_check_branch
      %2448 = sbr.rel (0) target = $region57
    $region56: #{tpu_custom_call.1} parent=1 // pred_region
      %s2450 = ssub.s32 512, 512
      %2451 = vsyncadd [#allocation4], %s2450
      %s2452 = sshll.u32 [#allocation7], 4
      %s2453 = int_to_ptr.vmem [resolvable:$true] %s2452
      %2458 = dma.vmem_to_hbm [thread:$0]  %s2453, 512, %s11, [#allocation4], 256, 256, 16
    $region57: #{tpu_custom_call.1} parent=1 // pred_fallthru
      _
    // Predicated region
    $region58: #{tpu_custom_call.1} parent=1 // pred_check
      _
    $region59: #{tpu_custom_call.1} parent=1 // pred_check_branch
      %2460 = sbr.rel (0) target = $region61
    $region60: #{tpu_custom_call.1} parent=1 // pred_region
      %2461 = dma.done [#allocation4], 512
    $region61: #{tpu_custom_call.1} parent=1 // pred_fallthru
      _
    %2462 = vsyncpa [#allocation3], 1
    %2463 = vsyncpa [#allocation6], 1
    %2464 = vsyncpa [#allocation4], 1

</llo_original>
